<compile_context>
chip_gen: v7x
topology: tpu7x:2x2x1
jax: 0.10.0
libtpu: 0.0.40
codegen_flags: <defaults>
</compile_context>

<pallas_src>
import jax
import jax.numpy as jnp
from jax import lax
from jax.experimental import pallas as pl
from jax.experimental.pallas import tpu as pltpu

EPS = 1e-5  # nn.InstanceNorm2d default


def _reflect_conv3x3(a, w_ref, H, W, C):
    """Reflect(1)-padded 3x3 conv without materializing any padded tensor.

    a:     (H, W, C) bf16 un-padded input.
    w_ref: ref of shape (3, 3*C, C) bf16, indexed [kh, kw*C + ci, co].
    Returns (H, W, C) f32 (no bias: it is a no-op before InstanceNorm).
    """
    # Horizontal (W axis) reflect-shifted taps, fused on the lane axis -> K=3C.
    a_l = jnp.concatenate([a[:, 1:2, :], a[:, :W - 1, :]], axis=1)      # x[:, refl(j-1)]
    a_r = jnp.concatenate([a[:, 1:, :], a[:, W - 2:W - 1, :]], axis=1)  # x[:, refl(j+1)]
    p = jnp.concatenate([a_l, a, a_r], axis=2).reshape(H * W, 3 * C)    # (H*W, 3C)

    # out[i] = sum_kh dot(p[refl(i+kh-1)], w[kh]) = sum_kh r_kh[refl(i+kh-1)]
    # with r_kh = dot(p, w[kh]) computed on un-shifted rows: shift the small
    # f32 result along H (outer, untiled axis) instead of the bf16 input slab.
    acc = jnp.dot(p, w_ref[1], preferred_element_type=jnp.float32).reshape(H, W, C)

    r = jnp.dot(p, w_ref[0], preferred_element_type=jnp.float32).reshape(H, W, C)
    acc = acc + jnp.concatenate([r[1:2], r[:H - 1]], axis=0)            # rows refl(i-1)

    r = jnp.dot(p, w_ref[2], preferred_element_type=jnp.float32).reshape(H, W, C)
    acc = acc + jnp.concatenate([r[1:], r[H - 2:H - 1]], axis=0)        # rows refl(i+1)
    return acc


def _instance_norm(y, H, W):
    """InstanceNorm2d(affine=False): per-channel over (H, W), f32, one stats pass."""
    inv_n = jnp.float32(1.0 / (H * W))
    s = jnp.sum(y, axis=(0, 1), keepdims=True)
    ss = jnp.sum(y * y, axis=(0, 1), keepdims=True)
    mean = s * inv_n
    # One-pass variance; clamp guards cancellation (low risk now that the inert
    # pre-IN bias is no longer added).
    var = jnp.maximum(ss * inv_n - mean * mean, 0.0)
    return (y - mean) * lax.rsqrt(var + EPS)


def resnet_block_kernel(x_ref, w1_ref, w2_ref, o_ref):
    # One grid step == one batch sample.
    xb = x_ref[0].astype(jnp.bfloat16)          # conv operand; no f32 copy kept
    H, W, C = xb.shape

    # conv1 -> instance norm -> ReLU -> bf16, as one fused expression.
    y = _reflect_conv3x3(xb, w1_ref, H, W, C)
    yb = jnp.maximum(_instance_norm(y, H, W), 0.0).astype(jnp.bfloat16)

    # conv2 -> instance norm
    z = _instance_norm(_reflect_conv3x3(yb, w2_ref, H, W, C), H, W)

    # residual add in f32 (input re-read here; never held in f32 across the body)
    o_ref[0] = (x_ref[0].astype(jnp.float32) + z).astype(o_ref.dtype)


def _vmem_limit_bytes():
    """Per-generation VMEM budget: ~3/4 of physical VMEM (capped), so v7x's
    64 MiB keeps headroom for compiler scratch and pipeline double buffers."""
    try:
        cap = pltpu.get_tpu_info().vmem_capacity_bytes
        return min(max(32 * 1024 * 1024, (3 * cap) // 4), 112 * 1024 * 1024)
    except Exception:  # query unavailable -> conservative default
        return 32 * 1024 * 1024


def resnet_block(x_nhwc, w1, b1, w2, b2):
    """x_nhwc: (B, H, W, C). w*: (3, 3, C, C) HWIO. b*: (C,) — accepted but unused:
    a per-channel bias immediately before InstanceNorm(affine=False) is removed
    exactly by the mean subtraction, so the kernel skips the bias math and DMAs."""
    del b1, b2
    B, H, W, C = x_nhwc.shape
    assert H >= 2 and W >= 2, "reflect pad(1) needs H, W >= 2"

    # Each kh tap is one (H*W, 3C) @ (3C, C) matmul; conv operands in bf16.
    w1r = w1.reshape(3, 3 * C, C).astype(jnp.bfloat16)
    w2r = w2.reshape(3, 3 * C, C).astype(jnp.bfloat16)

    return pl.pallas_call(
        resnet_block_kernel,
        out_shape=jax.ShapeDtypeStruct((B, H, W, C), x_nhwc.dtype),
        grid_spec=pltpu.PrefetchScalarGridSpec(
            num_scalar_prefetch=0,
            grid=(B,),
            in_specs=[
                pl.BlockSpec((1, H, W, C), lambda b: (b, 0, 0, 0)),
                # Constant block index across the grid -> fetched once, kept resident.
                pl.BlockSpec((3, 3 * C, C), lambda b: (0, 0, 0)),
                pl.BlockSpec((3, 3 * C, C), lambda b: (0, 0, 0)),
            ],
            out_specs=pl.BlockSpec((1, H, W, C), lambda b: (b, 0, 0, 0)),
        ),
        compiler_params=pltpu.CompilerParams(
            dimension_semantics=("parallel",),
            vmem_limit_bytes=_vmem_limit_bytes(),
        ),
    )(x_nhwc, w1r, w2r)


def _reference(x, w1, b1, w2, b2, conv_dtype):
    """Pure-JAX reference (NHWC, HWIO) matching the PyTorch module, *with* bias.
    conv_dtype controls the matmul operand dtype."""
    def conv(a, w, b):
        ap = jnp.pad(a, ((0, 0), (1, 1), (1, 1), (0, 0)), mode="reflect")
        y = lax.conv_general_dilated(
            ap.astype(conv_dtype), w.astype(conv_dtype),
            window_strides=(1, 1), padding="VALID",
            dimension_numbers=("NHWC", "HWIO", "NHWC"),
            preferred_element_type=jnp.float32)
        return y + b.reshape(1, 1, 1, -1).astype(jnp.float32)

    def inorm(y):
        m = jnp.mean(y, axis=(1, 2), keepdims=True)
        v = jnp.mean((y - m) ** 2, axis=(1, 2), keepdims=True)
        return (y - m) / jnp.sqrt(v + EPS)

    y = jnp.maximum(inorm(conv(x, w1, b1)), 0.0)
    z = inorm(conv(y, w2, b2))
    return x.astype(jnp.float32) + z


def _make_case(key, B, C, H, W):
    k_x, k_w1, k_b1, k_w2, k_b2 = jax.random.split(key, 5)
    x_nchw = jax.random.normal(k_x, (B, C, H, W), jnp.float32)
    x_nhwc = jnp.transpose(x_nchw, (0, 2, 3, 1))            # NCHW -> NHWC
    w1 = 0.1 * jax.random.normal(k_w1, (3, 3, C, C), jnp.float32)
    b1 = 0.1 * jax.random.normal(k_b1, (C,), jnp.float32)
    w2 = 0.1 * jax.random.normal(k_w2, (3, 3, C, C), jnp.float32)
    b2 = 0.1 * jax.random.normal(k_b2, (C,), jnp.float32)
    return x_nhwc, w1, b1, w2, b2


if __name__ == "__main__":
    key = jax.random.PRNGKey(0)
    k_small, k_large = jax.random.split(key)

    # --- small demo shape (PyTorch input would be (2, 4, 16, 16) NCHW) ---
    x, w1, b1, w2, b2 = _make_case(k_small, B=2, C=4, H=16, W=16)
    out = jax.block_until_ready(resnet_block(x, w1, b1, w2, b2))
    assert out.shape == x.shape

    # Tight check vs a reference using the same bf16 conv operands (and bias,
    # demonstrating the bias is a no-op before InstanceNorm).
    ref_bf16 = jax.block_until_ready(_reference(x, w1, b1, w2, b2, jnp.bfloat16))
    assert jnp.max(jnp.abs(out - ref_bf16)) < 1e-2, "mismatch vs bf16-conv reference"

    # Looser sanity check vs the full-f32 reference (bf16 matmul rounding).
    ref_f32 = jax.block_until_ready(_reference(x, w1, b1, w2, b2, jnp.float32))
    assert jnp.max(jnp.abs(out - ref_f32)) < 1.5e-1, "mismatch vs f32 reference"

    # --- lane-dense validation (C = 128): exercises the layout the kernel is
    # actually meant to ship at, per the review's correctness concern ---
    xl, w1l, b1l, w2l, b2l = _make_case(k_large, B=2, C=128, H=8, W=8)
    out_l = jax.block_until_ready(resnet_block(xl, w1l, b1l, w2l, b2l))
    ref_l = jax.block_until_ready(_reference(xl, w1l, b1l, w2l, b2l, jnp.bfloat16))
    assert jnp.max(jnp.abs(out_l - ref_l)) < 2e-2, "mismatch vs bf16 reference (C=128)"

    print("KERNEL_OK")
</pallas_src>

<mosaic_0001>
module attributes {stable_mosaic.version = 11 : i64} {
  func.func @resnet_block_kernel(%arg0: i32, %arg1: memref<1x16x16x4xf32, #tpu.memory_space<vmem>>, %arg2: memref<3x12x4xbf16, #tpu.memory_space<vmem>>, %arg3: memref<3x12x4xbf16, #tpu.memory_space<vmem>>, %arg4: memref<1x16x16x4xf32, #tpu.memory_space<vmem>>) attributes {dimension_semantics = [#tpu.dimension_semantics<parallel>], iteration_bounds = array<i64: 2>, scalar_prefetch = 0 : i64, scratch_operands = 0 : i64, tpu.core_type = #tpu.core_type<tc>, window_params = [{transform_indices = @transform_0, window_bounds = array<i64: 1, 16, 16, 4>}, {pipeline_mode = #tpu.pipeline_mode<synchronous>, transform_indices = @transform_1, window_bounds = array<i64: 3, 12, 4>}, {pipeline_mode = #tpu.pipeline_mode<synchronous>, transform_indices = @transform_2, window_bounds = array<i64: 3, 12, 4>}, {transform_indices = @transform_3, window_bounds = array<i64: 1, 16, 16, 4>}]} {
    %c0 = arith.constant 0 : index
    %c0_0 = arith.constant 0 : index
    %c0_1 = arith.constant 0 : index
    %c0_2 = arith.constant 0 : index
    %0 = vector.load %arg1[%c0, %c0_0, %c0_1, %c0_2] : memref<1x16x16x4xf32, #tpu.memory_space<vmem>>, vector<1x16x16x4xf32>
    %1 = vector.shape_cast %0 : vector<1x16x16x4xf32> to vector<16x16x4xf32>
    %2 = arith.truncf %1 : vector<16x16x4xf32> to vector<16x16x4xbf16>
    %3 = vector.extract_strided_slice %2 {offsets = [0, 1, 0], sizes = [16, 1, 4], strides = [1, 1, 1]} : vector<16x16x4xbf16> to vector<16x1x4xbf16>
    %4 = vector.extract_strided_slice %2 {offsets = [0, 0, 0], sizes = [16, 15, 4], strides = [1, 1, 1]} : vector<16x16x4xbf16> to vector<16x15x4xbf16>
    %5 = tpu.concatenate %3, %4 in 1 : vector<16x1x4xbf16>, vector<16x15x4xbf16> -> vector<16x16x4xbf16>
    %6 = vector.extract_strided_slice %2 {offsets = [0, 1, 0], sizes = [16, 15, 4], strides = [1, 1, 1]} : vector<16x16x4xbf16> to vector<16x15x4xbf16>
    %7 = vector.extract_strided_slice %2 {offsets = [0, 14, 0], sizes = [16, 1, 4], strides = [1, 1, 1]} : vector<16x16x4xbf16> to vector<16x1x4xbf16>
    %8 = tpu.concatenate %6, %7 in 1 : vector<16x15x4xbf16>, vector<16x1x4xbf16> -> vector<16x16x4xbf16>
    %9 = tpu.concatenate %5, %2, %8 in 2 : vector<16x16x4xbf16>, vector<16x16x4xbf16>, vector<16x16x4xbf16> -> vector<16x16x12xbf16>
    %10 = vector.shape_cast %9 : vector<16x16x12xbf16> to vector<256x12xbf16>
    %c1 = arith.constant 1 : index
    %c0_3 = arith.constant 0 : index
    %c0_4 = arith.constant 0 : index
    %11 = vector.load %arg2[%c1, %c0_3, %c0_4] : memref<3x12x4xbf16, #tpu.memory_space<vmem>>, vector<1x12x4xbf16>
    %12 = vector.shape_cast %11 : vector<1x12x4xbf16> to vector<12x4xbf16>
    %cst = arith.constant dense<0.000000e+00> : vector<256x4xf32>
    %13 = tpu.matmul %10, %12, %cst {dimension_numbers = #tpu.dot_dimension_numbers<[1], [0], [0], [1], [0, 0, 1, 1], [], []>} : vector<256x12xbf16>, vector<12x4xbf16>, vector<256x4xf32> -> vector<256x4xf32>
    %14 = vector.shape_cast %13 : vector<256x4xf32> to vector<16x16x4xf32>
    %c0_5 = arith.constant 0 : index
    %c0_6 = arith.constant 0 : index
    %c0_7 = arith.constant 0 : index
    %15 = vector.load %arg2[%c0_5, %c0_6, %c0_7] : memref<3x12x4xbf16, #tpu.memory_space<vmem>>, vector<1x12x4xbf16>
    %16 = vector.shape_cast %15 : vector<1x12x4xbf16> to vector<12x4xbf16>
    %cst_8 = arith.constant dense<0.000000e+00> : vector<256x4xf32>
    %17 = tpu.matmul %10, %16, %cst_8 {dimension_numbers = #tpu.dot_dimension_numbers<[1], [0], [0], [1], [0, 0, 1, 1], [], []>} : vector<256x12xbf16>, vector<12x4xbf16>, vector<256x4xf32> -> vector<256x4xf32>
    %18 = vector.shape_cast %17 : vector<256x4xf32> to vector<16x16x4xf32>
    %19 = vector.extract_strided_slice %18 {offsets = [1, 0, 0], sizes = [1, 16, 4], strides = [1, 1, 1]} : vector<16x16x4xf32> to vector<1x16x4xf32>
    %20 = vector.extract_strided_slice %18 {offsets = [0, 0, 0], sizes = [15, 16, 4], strides = [1, 1, 1]} : vector<16x16x4xf32> to vector<15x16x4xf32>
    %21 = tpu.concatenate %19, %20 in 0 : vector<1x16x4xf32>, vector<15x16x4xf32> -> vector<16x16x4xf32>
    %22 = arith.addf %14, %21 : vector<16x16x4xf32>
    %c2 = arith.constant 2 : index
    %c0_9 = arith.constant 0 : index
    %c0_10 = arith.constant 0 : index
    %23 = vector.load %arg2[%c2, %c0_9, %c0_10] : memref<3x12x4xbf16, #tpu.memory_space<vmem>>, vector<1x12x4xbf16>
    %24 = vector.shape_cast %23 : vector<1x12x4xbf16> to vector<12x4xbf16>
    %cst_11 = arith.constant dense<0.000000e+00> : vector<256x4xf32>
    %25 = tpu.matmul %10, %24, %cst_11 {dimension_numbers = #tpu.dot_dimension_numbers<[1], [0], [0], [1], [0, 0, 1, 1], [], []>} : vector<256x12xbf16>, vector<12x4xbf16>, vector<256x4xf32> -> vector<256x4xf32>
    %26 = vector.shape_cast %25 : vector<256x4xf32> to vector<16x16x4xf32>
    %27 = vector.extract_strided_slice %26 {offsets = [1, 0, 0], sizes = [15, 16, 4], strides = [1, 1, 1]} : vector<16x16x4xf32> to vector<15x16x4xf32>
    %28 = vector.extract_strided_slice %26 {offsets = [14, 0, 0], sizes = [1, 16, 4], strides = [1, 1, 1]} : vector<16x16x4xf32> to vector<1x16x4xf32>
    %29 = tpu.concatenate %27, %28 in 0 : vector<15x16x4xf32>, vector<1x16x4xf32> -> vector<16x16x4xf32>
    %30 = arith.addf %22, %29 : vector<16x16x4xf32>
    %cst_12 = arith.constant dense<0.000000e+00> : vector<4xf32>
    %31 = vector.multi_reduction <add>, %30, %cst_12 [0, 1] : vector<16x16x4xf32> to vector<4xf32>
    %32 = vector.shape_cast %31 : vector<4xf32> to vector<1x1x4xf32>
    %33 = arith.mulf %30, %30 : vector<16x16x4xf32>
    %cst_13 = arith.constant dense<0.000000e+00> : vector<4xf32>
    %34 = vector.multi_reduction <add>, %33, %cst_13 [0, 1] : vector<16x16x4xf32> to vector<4xf32>
    %35 = vector.shape_cast %34 : vector<4xf32> to vector<1x1x4xf32>
    %cst_14 = arith.constant 3.906250e-03 : f32
    %36 = vector.broadcast %cst_14 : f32 to vector<1x1x4xf32>
    %37 = arith.mulf %32, %36 : vector<1x1x4xf32>
    %cst_15 = arith.constant 3.906250e-03 : f32
    %38 = vector.broadcast %cst_15 : f32 to vector<1x1x4xf32>
    %39 = arith.mulf %35, %38 : vector<1x1x4xf32>
    %40 = arith.mulf %37, %37 : vector<1x1x4xf32>
    %41 = arith.subf %39, %40 : vector<1x1x4xf32>
    %cst_16 = arith.constant 0.000000e+00 : f32
    %42 = vector.broadcast %cst_16 : f32 to vector<1x1x4xf32>
    %43 = arith.maximumf %41, %42 : vector<1x1x4xf32>
    %44 = vector.broadcast %37 : vector<1x1x4xf32> to vector<16x16x4xf32>
    %45 = arith.subf %30, %44 : vector<16x16x4xf32>
    %cst_17 = arith.constant 9.99999974E-6 : f32
    %46 = vector.broadcast %cst_17 : f32 to vector<1x1x4xf32>
    %47 = arith.addf %43, %46 : vector<1x1x4xf32>
    %48 = math.rsqrt %47 : vector<1x1x4xf32>
    %49 = vector.broadcast %48 : vector<1x1x4xf32> to vector<16x16x4xf32>
    %50 = arith.mulf %45, %49 : vector<16x16x4xf32>
    %cst_18 = arith.constant 0.000000e+00 : f32
    %51 = vector.broadcast %cst_18 : f32 to vector<16x16x4xf32>
    %52 = arith.maximumf %50, %51 : vector<16x16x4xf32>
    %53 = arith.truncf %52 : vector<16x16x4xf32> to vector<16x16x4xbf16>
    %54 = vector.extract_strided_slice %53 {offsets = [0, 1, 0], sizes = [16, 1, 4], strides = [1, 1, 1]} : vector<16x16x4xbf16> to vector<16x1x4xbf16>
    %55 = vector.extract_strided_slice %53 {offsets = [0, 0, 0], sizes = [16, 15, 4], strides = [1, 1, 1]} : vector<16x16x4xbf16> to vector<16x15x4xbf16>
    %56 = tpu.concatenate %54, %55 in 1 : vector<16x1x4xbf16>, vector<16x15x4xbf16> -> vector<16x16x4xbf16>
    %57 = vector.extract_strided_slice %53 {offsets = [0, 1, 0], sizes = [16, 15, 4], strides = [1, 1, 1]} : vector<16x16x4xbf16> to vector<16x15x4xbf16>
    %58 = vector.extract_strided_slice %53 {offsets = [0, 14, 0], sizes = [16, 1, 4], strides = [1, 1, 1]} : vector<16x16x4xbf16> to vector<16x1x4xbf16>
    %59 = tpu.concatenate %57, %58 in 1 : vector<16x15x4xbf16>, vector<16x1x4xbf16> -> vector<16x16x4xbf16>
    %60 = tpu.concatenate %56, %53, %59 in 2 : vector<16x16x4xbf16>, vector<16x16x4xbf16>, vector<16x16x4xbf16> -> vector<16x16x12xbf16>
    %61 = vector.shape_cast %60 : vector<16x16x12xbf16> to vector<256x12xbf16>
    %c1_19 = arith.constant 1 : index
    %c0_20 = arith.constant 0 : index
    %c0_21 = arith.constant 0 : index
    %62 = vector.load %arg3[%c1_19, %c0_20, %c0_21] : memref<3x12x4xbf16, #tpu.memory_space<vmem>>, vector<1x12x4xbf16>
    %63 = vector.shape_cast %62 : vector<1x12x4xbf16> to vector<12x4xbf16>
    %cst_22 = arith.constant dense<0.000000e+00> : vector<256x4xf32>
    %64 = tpu.matmul %61, %63, %cst_22 {dimension_numbers = #tpu.dot_dimension_numbers<[1], [0], [0], [1], [0, 0, 1, 1], [], []>} : vector<256x12xbf16>, vector<12x4xbf16>, vector<256x4xf32> -> vector<256x4xf32>
    %65 = vector.shape_cast %64 : vector<256x4xf32> to vector<16x16x4xf32>
    %c0_23 = arith.constant 0 : index
    %c0_24 = arith.constant 0 : index
    %c0_25 = arith.constant 0 : index
    %66 = vector.load %arg3[%c0_23, %c0_24, %c0_25] : memref<3x12x4xbf16, #tpu.memory_space<vmem>>, vector<1x12x4xbf16>
    %67 = vector.shape_cast %66 : vector<1x12x4xbf16> to vector<12x4xbf16>
    %cst_26 = arith.constant dense<0.000000e+00> : vector<256x4xf32>
    %68 = tpu.matmul %61, %67, %cst_26 {dimension_numbers = #tpu.dot_dimension_numbers<[1], [0], [0], [1], [0, 0, 1, 1], [], []>} : vector<256x12xbf16>, vector<12x4xbf16>, vector<256x4xf32> -> vector<256x4xf32>
    %69 = vector.shape_cast %68 : vector<256x4xf32> to vector<16x16x4xf32>
    %70 = vector.extract_strided_slice %69 {offsets = [1, 0, 0], sizes = [1, 16, 4], strides = [1, 1, 1]} : vector<16x16x4xf32> to vector<1x16x4xf32>
    %71 = vector.extract_strided_slice %69 {offsets = [0, 0, 0], sizes = [15, 16, 4], strides = [1, 1, 1]} : vector<16x16x4xf32> to vector<15x16x4xf32>
    %72 = tpu.concatenate %70, %71 in 0 : vector<1x16x4xf32>, vector<15x16x4xf32> -> vector<16x16x4xf32>
    %73 = arith.addf %65, %72 : vector<16x16x4xf32>
    %c2_27 = arith.constant 2 : index
    %c0_28 = arith.constant 0 : index
    %c0_29 = arith.constant 0 : index
    %74 = vector.load %arg3[%c2_27, %c0_28, %c0_29] : memref<3x12x4xbf16, #tpu.memory_space<vmem>>, vector<1x12x4xbf16>
    %75 = vector.shape_cast %74 : vector<1x12x4xbf16> to vector<12x4xbf16>
    %cst_30 = arith.constant dense<0.000000e+00> : vector<256x4xf32>
    %76 = tpu.matmul %61, %75, %cst_30 {dimension_numbers = #tpu.dot_dimension_numbers<[1], [0], [0], [1], [0, 0, 1, 1], [], []>} : vector<256x12xbf16>, vector<12x4xbf16>, vector<256x4xf32> -> vector<256x4xf32>
    %77 = vector.shape_cast %76 : vector<256x4xf32> to vector<16x16x4xf32>
    %78 = vector.extract_strided_slice %77 {offsets = [1, 0, 0], sizes = [15, 16, 4], strides = [1, 1, 1]} : vector<16x16x4xf32> to vector<15x16x4xf32>
    %79 = vector.extract_strided_slice %77 {offsets = [14, 0, 0], sizes = [1, 16, 4], strides = [1, 1, 1]} : vector<16x16x4xf32> to vector<1x16x4xf32>
    %80 = tpu.concatenate %78, %79 in 0 : vector<15x16x4xf32>, vector<1x16x4xf32> -> vector<16x16x4xf32>
    %81 = arith.addf %73, %80 : vector<16x16x4xf32>
    %cst_31 = arith.constant dense<0.000000e+00> : vector<4xf32>
    %82 = vector.multi_reduction <add>, %81, %cst_31 [0, 1] : vector<16x16x4xf32> to vector<4xf32>
    %83 = vector.shape_cast %82 : vector<4xf32> to vector<1x1x4xf32>
    %84 = arith.mulf %81, %81 : vector<16x16x4xf32>
    %cst_32 = arith.constant dense<0.000000e+00> : vector<4xf32>
    %85 = vector.multi_reduction <add>, %84, %cst_32 [0, 1] : vector<16x16x4xf32> to vector<4xf32>
    %86 = vector.shape_cast %85 : vector<4xf32> to vector<1x1x4xf32>
    %cst_33 = arith.constant 3.906250e-03 : f32
    %87 = vector.broadcast %cst_33 : f32 to vector<1x1x4xf32>
    %88 = arith.mulf %83, %87 : vector<1x1x4xf32>
    %cst_34 = arith.constant 3.906250e-03 : f32
    %89 = vector.broadcast %cst_34 : f32 to vector<1x1x4xf32>
    %90 = arith.mulf %86, %89 : vector<1x1x4xf32>
    %91 = arith.mulf %88, %88 : vector<1x1x4xf32>
    %92 = arith.subf %90, %91 : vector<1x1x4xf32>
    %cst_35 = arith.constant 0.000000e+00 : f32
    %93 = vector.broadcast %cst_35 : f32 to vector<1x1x4xf32>
    %94 = arith.maximumf %92, %93 : vector<1x1x4xf32>
    %95 = vector.broadcast %88 : vector<1x1x4xf32> to vector<16x16x4xf32>
    %96 = arith.subf %81, %95 : vector<16x16x4xf32>
    %cst_36 = arith.constant 9.99999974E-6 : f32
    %97 = vector.broadcast %cst_36 : f32 to vector<1x1x4xf32>
    %98 = arith.addf %94, %97 : vector<1x1x4xf32>
    %99 = math.rsqrt %98 : vector<1x1x4xf32>
    %100 = vector.broadcast %99 : vector<1x1x4xf32> to vector<16x16x4xf32>
    %101 = arith.mulf %96, %100 : vector<16x16x4xf32>
    %c0_37 = arith.constant 0 : index
    %c0_38 = arith.constant 0 : index
    %c0_39 = arith.constant 0 : index
    %c0_40 = arith.constant 0 : index
    %102 = vector.load %arg1[%c0_37, %c0_38, %c0_39, %c0_40] : memref<1x16x16x4xf32, #tpu.memory_space<vmem>>, vector<1x16x16x4xf32>
    %103 = vector.shape_cast %102 : vector<1x16x16x4xf32> to vector<16x16x4xf32>
    %104 = arith.addf %103, %101 : vector<16x16x4xf32>
    %c0_41 = arith.constant 0 : index
    %c0_42 = arith.constant 0 : index
    %c0_43 = arith.constant 0 : index
    %c0_44 = arith.constant 0 : index
    %105 = vector.load %arg4[%c0_41, %c0_42, %c0_43, %c0_44] : memref<1x16x16x4xf32, #tpu.memory_space<vmem>>, vector<1x16x16x4xf32>
    %106 = vector.shape_cast %105 : vector<1x16x16x4xf32> to vector<16x16x4xf32>
    %107 = vector.shape_cast %104 : vector<16x16x4xf32> to vector<1x16x16x4xf32>
    tpu.vector_store %arg4[%c0_41, %c0_42, %c0_43, %c0_44], %107 {strides = array<i32>} : memref<1x16x16x4xf32, #tpu.memory_space<vmem>>, vector<1x16x16x4xf32>,
    return
  }
  func.func @transform_0(%arg0: i32) -> (i32, i32, i32, i32) {
    %c0_i32 = arith.constant 0 : i32
    %c0_i32_0 = arith.constant 0 : i32
    %c0_i32_1 = arith.constant 0 : i32
    %c0_i32_2 = arith.constant 0 : i32
    return %arg0, %c0_i32, %c0_i32_0, %c0_i32_1 : i32, i32, i32, i32
  }
  func.func @transform_1(%arg0: i32) -> (i32, i32, i32) {
    %c0_i32 = arith.constant 0 : i32
    %c0_i32_0 = arith.constant 0 : i32
    %c0_i32_1 = arith.constant 0 : i32
    %c0_i32_2 = arith.constant 0 : i32
    return %c0_i32, %c0_i32_0, %c0_i32_1 : i32, i32, i32
  }
  func.func @transform_2(%arg0: i32) -> (i32, i32, i32) {
    %c0_i32 = arith.constant 0 : i32
    %c0_i32_0 = arith.constant 0 : i32
    %c0_i32_1 = arith.constant 0 : i32
    %c0_i32_2 = arith.constant 0 : i32
    return %c0_i32, %c0_i32_0, %c0_i32_1 : i32, i32, i32
  }
  func.func @transform_3(%arg0: i32) -> (i32, i32, i32, i32) {
    %c0_i32 = arith.constant 0 : i32
    %c0_i32_0 = arith.constant 0 : i32
    %c0_i32_1 = arith.constant 0 : i32
    %c0_i32_2 = arith.constant 0 : i32
    return %arg0, %c0_i32, %c0_i32_0, %c0_i32_1 : i32, i32, i32, i32
  }
}

</mosaic_0001>

<llo_original>
// kernel: tpu_custom_call.1
$region0: #{tpu_custom_call.1}
  #allocation0 [shape = 'u32[]', space=smem, size = 0x4, offset = 0x4, fixed_abs, tag = 'smem constant byte address 0x4 - core index']
  #allocation1 [shape = 'u32[144,128]{1,0:T(1,128)}', space=vmem, size = 0x12000, scoped, tag = 'internal scratch']
  %s0 = inlined_call_operand.vmem [shape: f32[2,16,16,4], index: 0, kind: input, shape index: {}]
  %s1 = inlined_call_operand.vmem [shape: bf16[3,12,4], index: 1, kind: input, shape index: {}]
  %s2 = inlined_call_operand.vmem [shape: bf16[3,12,4], index: 2, kind: input, shape index: {}]
  %s3 = inlined_call_operand.vmem [shape: f32[2,16,16,4], index: 3, kind: output, shape index: {}]
  %s4 = sld [smem:[#allocation0]]
  $region45: #{tpu_custom_call.1} parent=0
    _
  %s6 = ssub.s32 1, %s4
  %s7 = scalar_select 0, %s6, %s4
  loop: start=0, step=1, limit=4
  $region2: #{tpu_custom_call.1} parent=0 // loop_pre_header
    _
  $region3: #{tpu_custom_call.1} parent=0 // loop_header
    %s9 = sphi 0, %s13
    %p10 = scmp.ge.s32.totalorder %s9, 4
    %s19 = sphi 0, %s21
    %s22 = sphi 0, %s19
    %s23 = sphi 0, %s22
    %s39 = sphi 0, %s23
    %s43 = sphi 0, %s43
    %s45 = sphi 0, %s43
    %s46 = sphi 0, %s45
    %s60 = sphi 0, %s46
    %s64 = sphi 0, %s64
    %s66 = sphi 0, %s64
    %s67 = sphi 0, %s66
    %s81 = sphi 0, %s67
    %s87 = sphi 0, %s89
    %s90 = sphi 0, %s87
    %s91 = sphi 0, %s90
    %s107 = sphi 0, %s91
  $region4: #{tpu_custom_call.1} parent=0 // loop_header_branch
    %12 = sbr.rel (%p10) target = $region8
  $region5: #{tpu_custom_call.1} parent=0 // loop_body
    %s14 = ssub.s32 %s9, 1
    %s15 = ssub.s32 %s9, 2
    %s16 = sadd.s32 %s9, 1
    %s17 = ssub.s32 %s9, %s16
    %p18 = scmp.eq.s32.totalorder %s17, 0
    %s20 = sadd.s32 %s19, 1
    %s21 = scalar_select %p18, %s19, %s20
    %p24 = pneg %p18
    %p25 = scmp.eq.s32.totalorder %s9, 1
    %p26 = por %p24, %p25
    %p27 = scmp.ne.s32.totalorder %s19, %s22
    %p28 = scmp.eq.s32.totalorder %s9, 0
    %p29 = por %p27, %p28
    %p30 = scmp.ne.s32.totalorder %s19, %s22
    %p31 = scmp.eq.s32.totalorder %s14, 1
    %p32 = por %p30, %p31
    %p33 = scmp.ne.s32.totalorder %s22, %s23
    %p34 = scmp.eq.s32.totalorder %s14, 0
    %p35 = por %p33, %p34
    %p36 = scmp.ne.s32.totalorder %s22, %s23
    %p37 = scmp.eq.s32.totalorder %s15, 1
    %p38 = por %p36, %p37
    %p40 = scmp.ne.s32.totalorder %s23, %s39
    %p41 = scmp.eq.s32.totalorder %s15, 0
    %p42 = por %p40, %p41
    %s44 = sadd.s32 %s43, 1
    %p47 = scmp.eq.s32.totalorder %s9, 1
    %p48 = scmp.ne.s32.totalorder %s43, %s45
    %p49 = scmp.eq.s32.totalorder %s9, 0
    %p50 = por %p48, %p49
    %p51 = scmp.ne.s32.totalorder %s43, %s45
    %p52 = scmp.eq.s32.totalorder %s14, 1
    %p53 = por %p51, %p52
    %p54 = scmp.ne.s32.totalorder %s45, %s46
    %p55 = scmp.eq.s32.totalorder %s14, 0
    %p56 = por %p54, %p55
    %p57 = scmp.ne.s32.totalorder %s45, %s46
    %p58 = scmp.eq.s32.totalorder %s15, 1
    %p59 = por %p57, %p58
    %p61 = scmp.ne.s32.totalorder %s46, %s60
    %p62 = scmp.eq.s32.totalorder %s15, 0
    %p63 = por %p61, %p62
    %s65 = sadd.s32 %s64, 1
    %p68 = scmp.eq.s32.totalorder %s9, 1
    %p69 = scmp.ne.s32.totalorder %s64, %s66
    %p70 = scmp.eq.s32.totalorder %s9, 0
    %p71 = por %p69, %p70
    %p72 = scmp.ne.s32.totalorder %s64, %s66
    %p73 = scmp.eq.s32.totalorder %s14, 1
    %p74 = por %p72, %p73
    %p75 = scmp.ne.s32.totalorder %s66, %s67
    %p76 = scmp.eq.s32.totalorder %s14, 0
    %p77 = por %p75, %p76
    %p78 = scmp.ne.s32.totalorder %s66, %s67
    %p79 = scmp.eq.s32.totalorder %s15, 1
    %p80 = por %p78, %p79
    %p82 = scmp.ne.s32.totalorder %s67, %s81
    %p83 = scmp.eq.s32.totalorder %s15, 0
    %p84 = por %p82, %p83
    %s85 = ssub.s32 %s9, %s16
    %p86 = scmp.eq.s32.totalorder %s85, 0
    %s88 = sadd.s32 %s87, 1
    %s89 = scalar_select %p86, %s87, %s88
    %p92 = pneg %p86
    %p93 = scmp.eq.s32.totalorder %s9, 1
    %p94 = por %p92, %p93
    %p95 = scmp.ne.s32.totalorder %s87, %s90
    %p96 = scmp.eq.s32.totalorder %s9, 0
    %p97 = por %p95, %p96
    %p98 = scmp.ne.s32.totalorder %s87, %s90
    %p99 = scmp.eq.s32.totalorder %s14, 1
    %p100 = por %p98, %p99
    %p101 = scmp.ne.s32.totalorder %s90, %s91
    %p102 = scmp.eq.s32.totalorder %s14, 0
    %p103 = por %p101, %p102
    %p104 = scmp.ne.s32.totalorder %s90, %s91
    %p105 = scmp.eq.s32.totalorder %s15, 1
    %p106 = por %p104, %p105
    %p108 = scmp.ne.s32.totalorder %s91, %s107
    %p109 = scmp.eq.s32.totalorder %s15, 0
    %p110 = por %p108, %p109
    %p111 = scmp.le.s32.totalorder 1, %s9
    %p112 = scmp.lt.s32.totalorder %s9, 3
    %p113 = pnand %p111, %p112
    %p114 = pneg %p113
    // Predicated region
    $region9: #{tpu_custom_call.1} parent=5 // pred_check
      _
    $region10: #{tpu_custom_call.1} parent=5 // pred_check_branch
      %116 = sbr.rel (%p113) target = $region12
    $region11: #{tpu_custom_call.1} parent=5 // pred_region
      %s117 = ssub.s32 %s9, 1
      // Predicated region
      $region13: #{tpu_custom_call.1} parent=11 // pred_check
        %p118 = pneg %p56
      $region14: #{tpu_custom_call.1} parent=11 // pred_check_branch
        %120 = sbr.rel (%p118) target = $region16
      $region15: #{tpu_custom_call.1} parent=11 // pred_region
        _
      $region16: #{tpu_custom_call.1} parent=11 // pred_fallthru
        _
      // Predicated region
      $region17: #{tpu_custom_call.1} parent=11 // pred_check
        %p121 = pneg %p77
      $region18: #{tpu_custom_call.1} parent=11 // pred_check_branch
        %123 = sbr.rel (%p121) target = $region20
      $region19: #{tpu_custom_call.1} parent=11 // pred_region
        _
      $region20: #{tpu_custom_call.1} parent=11 // pred_fallthru
        _
    $region12: #{tpu_custom_call.1} parent=5 // pred_fallthru
      _
    %p124 = scmp.lt.s32.totalorder %s9, 2
    // Predicated region
    $region21: #{tpu_custom_call.1} parent=5 // pred_check
      %p125 = pneg %p124
    $region22: #{tpu_custom_call.1} parent=5 // pred_check_branch
      %127 = sbr.rel (%p125) target = $region24
    $region23: #{tpu_custom_call.1} parent=5 // pred_region
      // Predicated region
      $region25: #{tpu_custom_call.1} parent=23 // pred_check
        %p128 = pneg %p29
      $region26: #{tpu_custom_call.1} parent=23 // pred_check_branch
        %130 = sbr.rel (%p128) target = $region28
      $region27: #{tpu_custom_call.1} parent=23 // pred_region
        %p131 = scmp.lt.s32.totalorder %s9, 1
        %s132 = scalar_select %p131, %s9, 1
        %s133 = smul.addr %s132, 32
        %s134 = smul.addr %s133, 8
        %s135 = scalar_lea.vmem %s0, %s134
      $region28: #{tpu_custom_call.1} parent=23 // pred_fallthru
        _
    $region24: #{tpu_custom_call.1} parent=5 // pred_fallthru
      _
    %p136 = scmp.le.s32.totalorder 1, %s9
    %p137 = scmp.lt.s32.totalorder %s9, 3
    %p138 = pnand %p136, %p137
    %p139 = pneg %p138
    // Predicated region
    $region29: #{tpu_custom_call.1} parent=5 // pred_check
      _
    $region30: #{tpu_custom_call.1} parent=5 // pred_check_branch
      %141 = sbr.rel (%p138) target = $region32
    $region31: #{tpu_custom_call.1} parent=5 // pred_region
      %s142 = ssub.s32 %s9, 1
      %p143 = scmp.lt.s32.totalorder %s14, 1
      %s144 = scalar_select %p143, %s14, 1
      %s145 = smul.addr %s144, 32
      %s146 = smul.addr %s145, 8
      %s147 = scalar_lea.vmem %s0, %s146
      %p148 = pneg %p35
      %p149 = pneg %p32
      %p150 = pneg %p56
      %p151 = pneg %p53
      %p152 = pneg %p77
      %p153 = pneg %p74
      %p154 = pneg %p103
      %p155 = pneg %p100
      %p156 = scmp.lt.s32.totalorder %s14, 1
      %s157 = scalar_select %p156, %s14, 1
      %s158 = smul.addr %s157, 32
      %s159 = smul.addr %s158, 8
      %s160 = scalar_lea.vmem %s3, %s159
      %p161 = scmp.lt.s32.totalorder %s14, 1
      %s162 = scalar_select %p161, %s14, 1
      %s163 = smul.addr %s162, 32
      %s164 = smul.addr %s163, 8
      %s165 = scalar_lea.vmem %s0, %s164
      %p166 = scmp.lt.s32.totalorder %s14, 1
      %s167 = scalar_select %p166, %s14, 1
      %s168 = smul.addr %s167, 32
      %s169 = smul.addr %s168, 8
      %s170 = scalar_lea.vmem %s3, %s169
      %v172 = vld [vmem:[%s165] sm:$0xff]
      %v173 = vld [vmem:[%s165 + $0x8] sm:$0xff]
      %v174 = vld [vmem:[%s165 + $0x10] sm:$0xff]
      %v175 = vld [vmem:[%s165 + $0x18] sm:$0xff]
      %v176 = vld [vmem:[%s165 + $0x20] sm:$0xff]
      %v177 = vld [vmem:[%s165 + $0x28] sm:$0xff]
      %v178 = vld [vmem:[%s165 + $0x30] sm:$0xff]
      %v179 = vld [vmem:[%s165 + $0x38] sm:$0xff]
      %v180 = vld [vmem:[%s165 + $0x40] sm:$0xff]
      %v181 = vld [vmem:[%s165 + $0x48] sm:$0xff]
      %v182 = vld [vmem:[%s165 + $0x50] sm:$0xff]
      %v183 = vld [vmem:[%s165 + $0x58] sm:$0xff]
      %v184 = vld [vmem:[%s165 + $0x60] sm:$0xff]
      %v185 = vld [vmem:[%s165 + $0x68] sm:$0xff]
      %v186 = vld [vmem:[%s165 + $0x70] sm:$0xff]
      %v187 = vld [vmem:[%s165 + $0x78] sm:$0xff]
      %v188 = vld [vmem:[%s165 + $0x80] sm:$0xff]
      %v189 = vld [vmem:[%s165 + $0x88] sm:$0xff]
      %v190 = vld [vmem:[%s165 + $0x90] sm:$0xff]
      %v191 = vld [vmem:[%s165 + $0x98] sm:$0xff]
      %v192 = vld [vmem:[%s165 + $0xa0] sm:$0xff]
      %v193 = vld [vmem:[%s165 + $0xa8] sm:$0xff]
      %v194 = vld [vmem:[%s165 + $0xb0] sm:$0xff]
      %v195 = vld [vmem:[%s165 + $0xb8] sm:$0xff]
      %v196 = vld [vmem:[%s165 + $0xc0] sm:$0xff]
      %v197 = vld [vmem:[%s165 + $0xc8] sm:$0xff]
      %v198 = vld [vmem:[%s165 + $0xd0] sm:$0xff]
      %v199 = vld [vmem:[%s165 + $0xd8] sm:$0xff]
      %v200 = vld [vmem:[%s165 + $0xe0] sm:$0xff]
      %v201 = vld [vmem:[%s165 + $0xe8] sm:$0xff]
      %v202 = vld [vmem:[%s165 + $0xf0] sm:$0xff]
      %v203 = vld [vmem:[%s165 + $0xf8] sm:$0xff]
      %v204 = vpack.c.bf16 %v173, %v172
      %v205 = vpack.c.bf16 %v175, %v174
      %v206 = vpack.c.bf16 %v177, %v176
      %v207 = vpack.c.bf16 %v179, %v178
      %v208 = vpack.c.bf16 %v181, %v180
      %v209 = vpack.c.bf16 %v183, %v182
      %v210 = vpack.c.bf16 %v185, %v184
      %v211 = vpack.c.bf16 %v187, %v186
      %v212 = vpack.c.bf16 %v189, %v188
      %v213 = vpack.c.bf16 %v191, %v190
      %v214 = vpack.c.bf16 %v193, %v192
      %v215 = vpack.c.bf16 %v195, %v194
      %v216 = vpack.c.bf16 %v197, %v196
      %v217 = vpack.c.bf16 %v199, %v198
      %v218 = vpack.c.bf16 %v201, %v200
      %v219 = vpack.c.bf16 %v203, %v202
      %v221 = vshrl.u32 %v204, 16
      %v224 = vshrl.u32 %v205, 16
      %v227 = vshrl.u32 %v206, 16
      %v230 = vshrl.u32 %v207, 16
      %v233 = vshrl.u32 %v208, 16
      %v236 = vshrl.u32 %v209, 16
      %v239 = vshrl.u32 %v210, 16
      %v242 = vshrl.u32 %v211, 16
      %v245 = vshrl.u32 %v212, 16
      %v248 = vshrl.u32 %v213, 16
      %v251 = vshrl.u32 %v214, 16
      %v254 = vshrl.u32 %v215, 16
      %v257 = vshrl.u32 %v216, 16
      %v260 = vshrl.u32 %v217, 16
      %v263 = vshrl.u32 %v218, 16
      %v266 = vshrl.u32 %v219, 16
      %v284 = vrot.slane %v221, 7
      %v285 = vshll.u32 %v204, 16
      %v287 = vor.u32 %v284, %v285
      %v288 = vrot.slane %v224, 7
      %v289 = vshll.u32 %v205, 16
      %v291 = vor.u32 %v288, %v289
      %v292 = vrot.slane %v227, 7
      %v293 = vshll.u32 %v206, 16
      %v295 = vor.u32 %v292, %v293
      %v296 = vrot.slane %v230, 7
      %v297 = vshll.u32 %v207, 16
      %v299 = vor.u32 %v296, %v297
      %v300 = vrot.slane %v233, 7
      %v301 = vshll.u32 %v208, 16
      %v303 = vor.u32 %v300, %v301
      %v304 = vrot.slane %v236, 7
      %v305 = vshll.u32 %v209, 16
      %v307 = vor.u32 %v304, %v305
      %v308 = vrot.slane %v239, 7
      %v309 = vshll.u32 %v210, 16
      %v311 = vor.u32 %v308, %v309
      %v312 = vrot.slane %v242, 7
      %v313 = vshll.u32 %v211, 16
      %v315 = vor.u32 %v312, %v313
      %v316 = vrot.slane %v245, 7
      %v317 = vshll.u32 %v212, 16
      %v319 = vor.u32 %v316, %v317
      %v320 = vrot.slane %v248, 7
      %v321 = vshll.u32 %v213, 16
      %v323 = vor.u32 %v320, %v321
      %v324 = vrot.slane %v251, 7
      %v325 = vshll.u32 %v214, 16
      %v327 = vor.u32 %v324, %v325
      %v328 = vrot.slane %v254, 7
      %v329 = vshll.u32 %v215, 16
      %v331 = vor.u32 %v328, %v329
      %v332 = vrot.slane %v257, 7
      %v333 = vshll.u32 %v216, 16
      %v335 = vor.u32 %v332, %v333
      %v336 = vrot.slane %v260, 7
      %v337 = vshll.u32 %v217, 16
      %v339 = vor.u32 %v336, %v337
      %v340 = vrot.slane %v263, 7
      %v341 = vshll.u32 %v218, 16
      %v343 = vor.u32 %v340, %v341
      %v344 = vrot.slane %v266, 7
      %v345 = vshll.u32 %v219, 16
      %v347 = vor.u32 %v344, %v345
      %vm364 = vcmask 1040384
      %vm365 = vsmask.f32 256
      %vm366 = vmand %vm364, %vm365
      %v367 = vsel %vm366, %v221, %v287
      %v368 = vsel %vm366, %v224, %v291
      %v369 = vsel %vm366, %v227, %v295
      %v370 = vsel %vm366, %v230, %v299
      %v371 = vsel %vm366, %v233, %v303
      %v372 = vsel %vm366, %v236, %v307
      %v373 = vsel %vm366, %v239, %v311
      %v374 = vsel %vm366, %v242, %v315
      %v375 = vsel %vm366, %v245, %v319
      %v376 = vsel %vm366, %v248, %v323
      %v377 = vsel %vm366, %v251, %v327
      %v378 = vsel %vm366, %v254, %v331
      %v379 = vsel %vm366, %v257, %v335
      %v380 = vsel %vm366, %v260, %v339
      %v381 = vsel %vm366, %v263, %v343
      %v382 = vsel %vm366, %v266, %v347
      %v383 = vrot.slane %v285, 1
      %v384 = vor.u32 %v221, %v383
      %v385 = vrot.slane %v289, 1
      %v386 = vor.u32 %v224, %v385
      %v387 = vrot.slane %v293, 1
      %v388 = vor.u32 %v227, %v387
      %v389 = vrot.slane %v297, 1
      %v390 = vor.u32 %v230, %v389
      %v391 = vrot.slane %v301, 1
      %v392 = vor.u32 %v233, %v391
      %v393 = vrot.slane %v305, 1
      %v394 = vor.u32 %v236, %v393
      %v395 = vrot.slane %v309, 1
      %v396 = vor.u32 %v239, %v395
      %v397 = vrot.slane %v313, 1
      %v398 = vor.u32 %v242, %v397
      %v399 = vrot.slane %v317, 1
      %v400 = vor.u32 %v245, %v399
      %v401 = vrot.slane %v321, 1
      %v402 = vor.u32 %v248, %v401
      %v403 = vrot.slane %v325, 1
      %v404 = vor.u32 %v251, %v403
      %v405 = vrot.slane %v329, 1
      %v406 = vor.u32 %v254, %v405
      %v407 = vrot.slane %v333, 1
      %v408 = vor.u32 %v257, %v407
      %v409 = vrot.slane %v337, 1
      %v410 = vor.u32 %v260, %v409
      %v411 = vrot.slane %v341, 1
      %v412 = vor.u32 %v263, %v411
      %v413 = vrot.slane %v345, 1
      %v414 = vor.u32 %v266, %v413
      %vm447 = vcmask 1047552
      %vm448 = vsmask.f32 7424
      %vm449 = vmand %vm447, %vm448
      %v450 = vsel %vm449, %v384, %v285
      %v451 = vsel %vm449, %v386, %v289
      %v452 = vsel %vm449, %v388, %v293
      %v453 = vsel %vm449, %v390, %v297
      %v454 = vsel %vm449, %v392, %v301
      %v455 = vsel %vm449, %v394, %v305
      %v456 = vsel %vm449, %v396, %v309
      %v457 = vsel %vm449, %v398, %v313
      %v458 = vsel %vm449, %v400, %v317
      %v459 = vsel %vm449, %v402, %v321
      %v460 = vsel %vm449, %v404, %v325
      %v461 = vsel %vm449, %v406, %v329
      %v462 = vsel %vm449, %v408, %v333
      %v463 = vsel %vm449, %v410, %v337
      %v464 = vsel %vm449, %v412, %v341
      %v465 = vsel %vm449, %v414, %v345
      %482 = vrot.lane.b32.xlu0 %v204, 4
      %v483 = vpop.permute.xlu0 %482
      %484 = vrot.lane.b32.xlu0 %v205, 4
      %v485 = vpop.permute.xlu0 %484
      %486 = vrot.lane.b32.xlu0 %v206, 4
      %v487 = vpop.permute.xlu0 %486
      %488 = vrot.lane.b32.xlu0 %v207, 4
      %v489 = vpop.permute.xlu0 %488
      %490 = vrot.lane.b32.xlu0 %v208, 4
      %v491 = vpop.permute.xlu0 %490
      %492 = vrot.lane.b32.xlu0 %v209, 4
      %v493 = vpop.permute.xlu0 %492
      %494 = vrot.lane.b32.xlu0 %v210, 4
      %v495 = vpop.permute.xlu0 %494
      %496 = vrot.lane.b32.xlu0 %v211, 4
      %v497 = vpop.permute.xlu0 %496
      %498 = vrot.lane.b32.xlu0 %v212, 4
      %v499 = vpop.permute.xlu0 %498
      %500 = vrot.lane.b32.xlu0 %v213, 4
      %v501 = vpop.permute.xlu0 %500
      %502 = vrot.lane.b32.xlu0 %v214, 4
      %v503 = vpop.permute.xlu0 %502
      %504 = vrot.lane.b32.xlu0 %v215, 4
      %v505 = vpop.permute.xlu0 %504
      %506 = vrot.lane.b32.xlu0 %v216, 4
      %v507 = vpop.permute.xlu0 %506
      %508 = vrot.lane.b32.xlu0 %v217, 4
      %v509 = vpop.permute.xlu0 %508
      %510 = vrot.lane.b32.xlu0 %v218, 4
      %v511 = vpop.permute.xlu0 %510
      %512 = vrot.lane.b32.xlu0 %v219, 4
      %v513 = vpop.permute.xlu0 %512
      %530 = vrot.lane.b32.xlu0 %v450, 8
      %v531 = vpop.permute.xlu0 %530
      %532 = vrot.lane.b32.xlu0 %v451, 8
      %v533 = vpop.permute.xlu0 %532
      %534 = vrot.lane.b32.xlu0 %v452, 8
      %v535 = vpop.permute.xlu0 %534
      %536 = vrot.lane.b32.xlu0 %v453, 8
      %v537 = vpop.permute.xlu0 %536
      %538 = vrot.lane.b32.xlu0 %v454, 8
      %v539 = vpop.permute.xlu0 %538
      %540 = vrot.lane.b32.xlu0 %v455, 8
      %v541 = vpop.permute.xlu0 %540
      %542 = vrot.lane.b32.xlu0 %v456, 8
      %v543 = vpop.permute.xlu0 %542
      %544 = vrot.lane.b32.xlu0 %v457, 8
      %v545 = vpop.permute.xlu0 %544
      %546 = vrot.lane.b32.xlu0 %v458, 8
      %v547 = vpop.permute.xlu0 %546
      %548 = vrot.lane.b32.xlu0 %v459, 8
      %v549 = vpop.permute.xlu0 %548
      %550 = vrot.lane.b32.xlu0 %v460, 8
      %v551 = vpop.permute.xlu0 %550
      %552 = vrot.lane.b32.xlu0 %v461, 8
      %v553 = vpop.permute.xlu0 %552
      %554 = vrot.lane.b32.xlu0 %v462, 8
      %v555 = vpop.permute.xlu0 %554
      %556 = vrot.lane.b32.xlu0 %v463, 8
      %v557 = vpop.permute.xlu0 %556
      %558 = vrot.lane.b32.xlu0 %v464, 8
      %v559 = vpop.permute.xlu0 %558
      %560 = vrot.lane.b32.xlu0 %v465, 8
      %v561 = vpop.permute.xlu0 %560
      %vm562 = vcmask 31744
      %v565 = vsel %vm562, %v367, %v483
      %v568 = vsel %vm562, %v368, %v485
      %v571 = vsel %vm562, %v369, %v487
      %v574 = vsel %vm562, %v370, %v489
      %v577 = vsel %vm562, %v371, %v491
      %v580 = vsel %vm562, %v372, %v493
      %v583 = vsel %vm562, %v373, %v495
      %v586 = vsel %vm562, %v374, %v497
      %v589 = vsel %vm562, %v375, %v499
      %v592 = vsel %vm562, %v376, %v501
      %v595 = vsel %vm562, %v377, %v503
      %v598 = vsel %vm562, %v378, %v505
      %v601 = vsel %vm562, %v379, %v507
      %v604 = vsel %vm562, %v380, %v509
      %v607 = vsel %vm562, %v381, %v511
      %v610 = vsel %vm562, %v382, %v513
      %vm611 = vcmask 64512
      %v613 = vsel %vm611, %v565, %v531
      %v615 = vsel %vm611, %v568, %v533
      %v617 = vsel %vm611, %v571, %v535
      %v619 = vsel %vm611, %v574, %v537
      %v621 = vsel %vm611, %v577, %v539
      %v623 = vsel %vm611, %v580, %v541
      %v625 = vsel %vm611, %v583, %v543
      %v627 = vsel %vm611, %v586, %v545
      %v629 = vsel %vm611, %v589, %v547
      %v631 = vsel %vm611, %v592, %v549
      %v633 = vsel %vm611, %v595, %v551
      %v635 = vsel %vm611, %v598, %v553
      %v637 = vsel %vm611, %v601, %v555
      %v639 = vsel %vm611, %v604, %v557
      %v641 = vsel %vm611, %v607, %v559
      %v643 = vsel %vm611, %v610, %v561
      %s644 = scalar_lea.vmem %s1, 8
      %v645 = vld [vmem:[%s644] sm:$0xf]
      %v646 = vld [vmem:[%s644 + $0x4] sm:$0x3]
      %v649 = vunpack.c.l.b16 %v645
      %v650 = vunpack.c.l.b16 %v646
      %v651 = vpack.c.b16 %v650, %v649
      %vm652 = vcmask 97280
      %v653 = vsel %vm652, %v613, 0
      %v655 = vsel %vm652, %v615, 0
      %v657 = vsel %vm652, %v617, 0
      %v659 = vsel %vm652, %v619, 0
      %v661 = vsel %vm652, %v621, 0
      %v663 = vsel %vm652, %v623, 0
      %v665 = vsel %vm652, %v625, 0
      %v667 = vsel %vm652, %v627, 0
      %v669 = vsel %vm652, %v629, 0
      %v671 = vsel %vm652, %v631, 0
      %v673 = vsel %vm652, %v633, 0
      %v675 = vsel %vm652, %v635, 0
      %v677 = vsel %vm652, %v637, 0
      %v679 = vsel %vm652, %v639, 0
      %v681 = vsel %vm652, %v641, 0
      %v683 = vsel %vm652, %v643, 0
      %vm685 = vcmask 1045504
      %v687 = vsel %vm685, %v651, 0
      %689 = vmatprep.subr.bf16.mxu0 0
      %690 = vmatpush1.bf16.msra.mxu0 %v687
      %691 = vmatprep.subr.bf16.mxu0 0
      %692 = vmatpush1.bf16.msra.mxu0 0
      %693 = vmatprep.subr.bf16.mxu0 0
      %694 = vmatpush1.bf16.msra.mxu0 0
      %695 = vmatprep.subr.bf16.mxu0 0
      %696 = vmatpush1.bf16.msra.mxu0 0
      %697 = vmatprep.subr.bf16.mxu0 0
      %698 = vmatpush1.bf16.msra.mxu0 0
      %699 = vmatprep.subr.bf16.mxu0 0
      %700 = vmatpush1.bf16.msra.mxu0 0
      %701 = vmatprep.subr.bf16.mxu0 0
      %702 = vmatpush1.bf16.msra.mxu0 0
      %703 = vmatprep.subr.bf16.mxu0 0
      %704 = vmatpush1.bf16.msra.mxu0 0
      %705 = vmatprep.subr.bf16.mxu0 0
      %706 = vmatpush1.bf16.msra.mxu0 0
      %707 = vmatprep.subr.bf16.mxu0 0
      %708 = vmatpush1.bf16.msra.mxu0 0
      %709 = vmatprep.subr.bf16.mxu0 0
      %710 = vmatpush1.bf16.msra.mxu0 0
      %711 = vmatprep.subr.bf16.mxu0 0
      %712 = vmatpush1.bf16.msra.mxu0 0
      %713 = vmatprep.subr.bf16.mxu0 0
      %714 = vmatpush1.bf16.msra.mxu0 0
      %715 = vmatprep.subr.bf16.mxu0 0
      %716 = vmatpush1.bf16.msra.mxu0 0
      %717 = vmatprep.subr.bf16.mxu0 0
      %718 = vmatpush1.bf16.msra.mxu0 0
      %719 = vmatprep.subr.bf16.mxu0 0
      %720 = vmatpush1.bf16.msra.mxu0 0
      %721 = vmatprep.mubr.bf16.mxu0 0
      %722 = vmatmul.mubr.bf16.gmra.mrb[0].mxu0 %v653
      %v723 = vpop.f32.mrb[0].mxu0
      %v724 = vadd.f32 0.0, %v723
      %v725 = vpop.f32.mrb[0].mxu0
      %v726 = vpop.f32.mrb[0].mxu0
      %v727 = vadd.f32 0.0, %v726
      %v728 = vpop.f32.mrb[0].mxu0
      %729 = vmatprep.mubr.bf16.mxu0 0
      %730 = vmatmul.mubr.bf16.gmra.mrb[0].mxu0 %v655
      %v731 = vpop.f32.mrb[0].mxu0
      %v732 = vadd.f32 0.0, %v731
      %v733 = vpop.f32.mrb[0].mxu0
      %v734 = vpop.f32.mrb[0].mxu0
      %v735 = vadd.f32 0.0, %v734
      %v736 = vpop.f32.mrb[0].mxu0
      %737 = vmatprep.mubr.bf16.mxu0 0
      %738 = vmatmul.mubr.bf16.gmra.mrb[0].mxu0 %v657
      %v739 = vpop.f32.mrb[0].mxu0
      %v740 = vadd.f32 0.0, %v739
      %v741 = vpop.f32.mrb[0].mxu0
      %v742 = vpop.f32.mrb[0].mxu0
      %v743 = vadd.f32 0.0, %v742
      %v744 = vpop.f32.mrb[0].mxu0
      %745 = vmatprep.mubr.bf16.mxu0 0
      %746 = vmatmul.mubr.bf16.gmra.mrb[0].mxu0 %v659
      %v747 = vpop.f32.mrb[0].mxu0
      %v748 = vadd.f32 0.0, %v747
      %v749 = vpop.f32.mrb[0].mxu0
      %v750 = vpop.f32.mrb[0].mxu0
      %v751 = vadd.f32 0.0, %v750
      %v752 = vpop.f32.mrb[0].mxu0
      %753 = vmatprep.mubr.bf16.mxu0 0
      %754 = vmatmul.mubr.bf16.gmra.mrb[0].mxu0 %v661
      %v755 = vpop.f32.mrb[0].mxu0
      %v756 = vadd.f32 0.0, %v755
      %v757 = vpop.f32.mrb[0].mxu0
      %v758 = vpop.f32.mrb[0].mxu0
      %v759 = vadd.f32 0.0, %v758
      %v760 = vpop.f32.mrb[0].mxu0
      %761 = vmatprep.mubr.bf16.mxu0 0
      %762 = vmatmul.mubr.bf16.gmra.mrb[0].mxu0 %v663
      %v763 = vpop.f32.mrb[0].mxu0
      %v764 = vadd.f32 0.0, %v763
      %v765 = vpop.f32.mrb[0].mxu0
      %v766 = vpop.f32.mrb[0].mxu0
      %v767 = vadd.f32 0.0, %v766
      %v768 = vpop.f32.mrb[0].mxu0
      %769 = vmatprep.mubr.bf16.mxu0 0
      %770 = vmatmul.mubr.bf16.gmra.mrb[0].mxu0 %v665
      %v771 = vpop.f32.mrb[0].mxu0
      %v772 = vadd.f32 0.0, %v771
      %v773 = vpop.f32.mrb[0].mxu0
      %v774 = vpop.f32.mrb[0].mxu0
      %v775 = vadd.f32 0.0, %v774
      %v776 = vpop.f32.mrb[0].mxu0
      %777 = vmatprep.mubr.bf16.mxu0 0
      %778 = vmatmul.mubr.bf16.gmra.mrb[0].mxu0 %v667
      %v779 = vpop.f32.mrb[0].mxu0
      %v780 = vadd.f32 0.0, %v779
      %v781 = vpop.f32.mrb[0].mxu0
      %v782 = vpop.f32.mrb[0].mxu0
      %v783 = vadd.f32 0.0, %v782
      %v784 = vpop.f32.mrb[0].mxu0
      %785 = vmatprep.mubr.bf16.mxu0 0
      %786 = vmatmul.mubr.bf16.gmra.mrb[0].mxu0 %v669
      %v787 = vpop.f32.mrb[0].mxu0
      %v788 = vadd.f32 0.0, %v787
      %v789 = vpop.f32.mrb[0].mxu0
      %v790 = vpop.f32.mrb[0].mxu0
      %v791 = vadd.f32 0.0, %v790
      %v792 = vpop.f32.mrb[0].mxu0
      %793 = vmatprep.mubr.bf16.mxu0 0
      %794 = vmatmul.mubr.bf16.gmra.mrb[0].mxu0 %v671
      %v795 = vpop.f32.mrb[0].mxu0
      %v796 = vadd.f32 0.0, %v795
      %v797 = vpop.f32.mrb[0].mxu0
      %v798 = vpop.f32.mrb[0].mxu0
      %v799 = vadd.f32 0.0, %v798
      %v800 = vpop.f32.mrb[0].mxu0
      %801 = vmatprep.mubr.bf16.mxu0 0
      %802 = vmatmul.mubr.bf16.gmra.mrb[0].mxu0 %v673
      %v803 = vpop.f32.mrb[0].mxu0
      %v804 = vadd.f32 0.0, %v803
      %v805 = vpop.f32.mrb[0].mxu0
      %v806 = vpop.f32.mrb[0].mxu0
      %v807 = vadd.f32 0.0, %v806
      %v808 = vpop.f32.mrb[0].mxu0
      %809 = vmatprep.mubr.bf16.mxu0 0
      %810 = vmatmul.mubr.bf16.gmra.mrb[0].mxu0 %v675
      %v811 = vpop.f32.mrb[0].mxu0
      %v812 = vadd.f32 0.0, %v811
      %v813 = vpop.f32.mrb[0].mxu0
      %v814 = vpop.f32.mrb[0].mxu0
      %v815 = vadd.f32 0.0, %v814
      %v816 = vpop.f32.mrb[0].mxu0
      %817 = vmatprep.mubr.bf16.mxu0 0
      %818 = vmatmul.mubr.bf16.gmra.mrb[0].mxu0 %v677
      %v819 = vpop.f32.mrb[0].mxu0
      %v820 = vadd.f32 0.0, %v819
      %v821 = vpop.f32.mrb[0].mxu0
      %v822 = vpop.f32.mrb[0].mxu0
      %v823 = vadd.f32 0.0, %v822
      %v824 = vpop.f32.mrb[0].mxu0
      %825 = vmatprep.mubr.bf16.mxu0 0
      %826 = vmatmul.mubr.bf16.gmra.mrb[0].mxu0 %v679
      %v827 = vpop.f32.mrb[0].mxu0
      %v828 = vadd.f32 0.0, %v827
      %v829 = vpop.f32.mrb[0].mxu0
      %v830 = vpop.f32.mrb[0].mxu0
      %v831 = vadd.f32 0.0, %v830
      %v832 = vpop.f32.mrb[0].mxu0
      %833 = vmatprep.mubr.bf16.mxu0 0
      %834 = vmatmul.mubr.bf16.gmra.mrb[0].mxu0 %v681
      %v835 = vpop.f32.mrb[0].mxu0
      %v836 = vadd.f32 0.0, %v835
      %v837 = vpop.f32.mrb[0].mxu0
      %v838 = vpop.f32.mrb[0].mxu0
      %v839 = vadd.f32 0.0, %v838
      %v840 = vpop.f32.mrb[0].mxu0
      %841 = vmatprep.mubr.bf16.mxu0 0
      %842 = vmatmul.mubr.bf16.gmra.mrb[0].mxu0 %v683
      %v843 = vpop.f32.mrb[0].mxu0
      %v844 = vadd.f32 0.0, %v843
      %v845 = vpop.f32.mrb[0].mxu0
      %v846 = vpop.f32.mrb[0].mxu0
      %v847 = vadd.f32 0.0, %v846
      %v848 = vpop.f32.mrb[0].mxu0
      %849 = vdwg.mxu0
      %v850 = vld [vmem:[%s1] sm:$0xf]
      %v851 = vld [vmem:[%s1 + $0x4] sm:$0x3]
      %v854 = vunpack.c.l.b16 %v850
      %v855 = vunpack.c.l.b16 %v851
      %v856 = vpack.c.b16 %v855, %v854
      %v858 = vsel %vm685, %v856, 0
      %860 = vmatprep.subr.bf16.mxu0 0
      %861 = vmatpush1.bf16.msra.mxu0 %v858
      %862 = vmatprep.subr.bf16.mxu0 0
      %863 = vmatpush1.bf16.msra.mxu0 0
      %864 = vmatprep.subr.bf16.mxu0 0
      %865 = vmatpush1.bf16.msra.mxu0 0
      %866 = vmatprep.subr.bf16.mxu0 0
      %867 = vmatpush1.bf16.msra.mxu0 0
      %868 = vmatprep.subr.bf16.mxu0 0
      %869 = vmatpush1.bf16.msra.mxu0 0
      %870 = vmatprep.subr.bf16.mxu0 0
      %871 = vmatpush1.bf16.msra.mxu0 0
      %872 = vmatprep.subr.bf16.mxu0 0
      %873 = vmatpush1.bf16.msra.mxu0 0
      %874 = vmatprep.subr.bf16.mxu0 0
      %875 = vmatpush1.bf16.msra.mxu0 0
      %876 = vmatprep.subr.bf16.mxu0 0
      %877 = vmatpush1.bf16.msra.mxu0 0
      %878 = vmatprep.subr.bf16.mxu0 0
      %879 = vmatpush1.bf16.msra.mxu0 0
      %880 = vmatprep.subr.bf16.mxu0 0
      %881 = vmatpush1.bf16.msra.mxu0 0
      %882 = vmatprep.subr.bf16.mxu0 0
      %883 = vmatpush1.bf16.msra.mxu0 0
      %884 = vmatprep.subr.bf16.mxu0 0
      %885 = vmatpush1.bf16.msra.mxu0 0
      %886 = vmatprep.subr.bf16.mxu0 0
      %887 = vmatpush1.bf16.msra.mxu0 0
      %888 = vmatprep.subr.bf16.mxu0 0
      %889 = vmatpush1.bf16.msra.mxu0 0
      %890 = vmatprep.subr.bf16.mxu0 0
      %891 = vmatpush1.bf16.msra.mxu0 0
      %892 = vmatprep.mubr.bf16.mxu0 0
      %893 = vmatmul.mubr.bf16.gmra.mrb[0].mxu0 %v653
      %v894 = vpop.f32.mrb[0].mxu0
      %v895 = vadd.f32 0.0, %v894
      %v896 = vpop.f32.mrb[0].mxu0
      %v897 = vpop.f32.mrb[0].mxu0
      %v898 = vadd.f32 0.0, %v897
      %v899 = vpop.f32.mrb[0].mxu0
      %900 = vmatprep.mubr.bf16.mxu0 0
      %901 = vmatmul.mubr.bf16.gmra.mrb[0].mxu0 %v655
      %v902 = vpop.f32.mrb[0].mxu0
      %v903 = vadd.f32 0.0, %v902
      %v904 = vpop.f32.mrb[0].mxu0
      %v905 = vpop.f32.mrb[0].mxu0
      %v906 = vadd.f32 0.0, %v905
      %v907 = vpop.f32.mrb[0].mxu0
      %908 = vmatprep.mubr.bf16.mxu0 0
      %909 = vmatmul.mubr.bf16.gmra.mrb[0].mxu0 %v657
      %v910 = vpop.f32.mrb[0].mxu0
      %v911 = vadd.f32 0.0, %v910
      %v912 = vpop.f32.mrb[0].mxu0
      %v913 = vpop.f32.mrb[0].mxu0
      %v914 = vadd.f32 0.0, %v913
      %v915 = vpop.f32.mrb[0].mxu0
      %916 = vmatprep.mubr.bf16.mxu0 0
      %917 = vmatmul.mubr.bf16.gmra.mrb[0].mxu0 %v659
      %v918 = vpop.f32.mrb[0].mxu0
      %v919 = vadd.f32 0.0, %v918
      %v920 = vpop.f32.mrb[0].mxu0
      %v921 = vpop.f32.mrb[0].mxu0
      %v922 = vadd.f32 0.0, %v921
      %v923 = vpop.f32.mrb[0].mxu0
      %924 = vmatprep.mubr.bf16.mxu0 0
      %925 = vmatmul.mubr.bf16.gmra.mrb[0].mxu0 %v661
      %v926 = vpop.f32.mrb[0].mxu0
      %v927 = vadd.f32 0.0, %v926
      %v928 = vpop.f32.mrb[0].mxu0
      %v929 = vpop.f32.mrb[0].mxu0
      %v930 = vadd.f32 0.0, %v929
      %v931 = vpop.f32.mrb[0].mxu0
      %932 = vmatprep.mubr.bf16.mxu0 0
      %933 = vmatmul.mubr.bf16.gmra.mrb[0].mxu0 %v663
      %v934 = vpop.f32.mrb[0].mxu0
      %v935 = vadd.f32 0.0, %v934
      %v936 = vpop.f32.mrb[0].mxu0
      %v937 = vpop.f32.mrb[0].mxu0
      %v938 = vadd.f32 0.0, %v937
      %v939 = vpop.f32.mrb[0].mxu0
      %940 = vmatprep.mubr.bf16.mxu0 0
      %941 = vmatmul.mubr.bf16.gmra.mrb[0].mxu0 %v665
      %v942 = vpop.f32.mrb[0].mxu0
      %v943 = vadd.f32 0.0, %v942
      %v944 = vpop.f32.mrb[0].mxu0
      %v945 = vpop.f32.mrb[0].mxu0
      %v946 = vadd.f32 0.0, %v945
      %v947 = vpop.f32.mrb[0].mxu0
      %948 = vmatprep.mubr.bf16.mxu0 0
      %949 = vmatmul.mubr.bf16.gmra.mrb[0].mxu0 %v667
      %v950 = vpop.f32.mrb[0].mxu0
      %v951 = vadd.f32 0.0, %v950
      %v952 = vpop.f32.mrb[0].mxu0
      %v953 = vpop.f32.mrb[0].mxu0
      %v954 = vadd.f32 0.0, %v953
      %v955 = vpop.f32.mrb[0].mxu0
      %956 = vmatprep.mubr.bf16.mxu0 0
      %957 = vmatmul.mubr.bf16.gmra.mrb[0].mxu0 %v669
      %v958 = vpop.f32.mrb[0].mxu0
      %v959 = vadd.f32 0.0, %v958
      %v960 = vpop.f32.mrb[0].mxu0
      %v961 = vpop.f32.mrb[0].mxu0
      %v962 = vadd.f32 0.0, %v961
      %v963 = vpop.f32.mrb[0].mxu0
      %964 = vmatprep.mubr.bf16.mxu0 0
      %965 = vmatmul.mubr.bf16.gmra.mrb[0].mxu0 %v671
      %v966 = vpop.f32.mrb[0].mxu0
      %v967 = vadd.f32 0.0, %v966
      %v968 = vpop.f32.mrb[0].mxu0
      %v969 = vpop.f32.mrb[0].mxu0
      %v970 = vadd.f32 0.0, %v969
      %v971 = vpop.f32.mrb[0].mxu0
      %972 = vmatprep.mubr.bf16.mxu0 0
      %973 = vmatmul.mubr.bf16.gmra.mrb[0].mxu0 %v673
      %v974 = vpop.f32.mrb[0].mxu0
      %v975 = vadd.f32 0.0, %v974
      %v976 = vpop.f32.mrb[0].mxu0
      %v977 = vpop.f32.mrb[0].mxu0
      %v978 = vadd.f32 0.0, %v977
      %v979 = vpop.f32.mrb[0].mxu0
      %980 = vmatprep.mubr.bf16.mxu0 0
      %981 = vmatmul.mubr.bf16.gmra.mrb[0].mxu0 %v675
      %v982 = vpop.f32.mrb[0].mxu0
      %v983 = vadd.f32 0.0, %v982
      %v984 = vpop.f32.mrb[0].mxu0
      %v985 = vpop.f32.mrb[0].mxu0
      %v986 = vadd.f32 0.0, %v985
      %v987 = vpop.f32.mrb[0].mxu0
      %988 = vmatprep.mubr.bf16.mxu0 0
      %989 = vmatmul.mubr.bf16.gmra.mrb[0].mxu0 %v677
      %v990 = vpop.f32.mrb[0].mxu0
      %v991 = vadd.f32 0.0, %v990
      %v992 = vpop.f32.mrb[0].mxu0
      %v993 = vpop.f32.mrb[0].mxu0
      %v994 = vadd.f32 0.0, %v993
      %v995 = vpop.f32.mrb[0].mxu0
      %996 = vmatprep.mubr.bf16.mxu0 0
      %997 = vmatmul.mubr.bf16.gmra.mrb[0].mxu0 %v679
      %v998 = vpop.f32.mrb[0].mxu0
      %v999 = vadd.f32 0.0, %v998
      %v1000 = vpop.f32.mrb[0].mxu0
      %v1001 = vpop.f32.mrb[0].mxu0
      %v1002 = vadd.f32 0.0, %v1001
      %v1003 = vpop.f32.mrb[0].mxu0
      %1004 = vmatprep.mubr.bf16.mxu0 0
      %1005 = vmatmul.mubr.bf16.gmra.mrb[0].mxu0 %v681
      %v1006 = vpop.f32.mrb[0].mxu0
      %v1007 = vadd.f32 0.0, %v1006
      %v1008 = vpop.f32.mrb[0].mxu0
      %v1009 = vpop.f32.mrb[0].mxu0
      %v1010 = vadd.f32 0.0, %v1009
      %v1011 = vpop.f32.mrb[0].mxu0
      %1012 = vmatprep.mubr.bf16.mxu0 0
      %1013 = vmatmul.mubr.bf16.gmra.mrb[0].mxu0 %v683
      %v1014 = vpop.f32.mrb[0].mxu0
      %v1015 = vpop.f32.mrb[0].mxu0
      %v1016 = vpop.f32.mrb[0].mxu0
      %v1017 = vpop.f32.mrb[0].mxu0
      %1018 = vdwg.mxu0
      %v1019 = vadd.f32 %v724, %v903
      %v1020 = vadd.f32 %v727, %v906
      %v1021 = vadd.f32 %v732, %v895
      %v1022 = vadd.f32 %v735, %v898
      %v1023 = vadd.f32 %v740, %v903
      %v1024 = vadd.f32 %v743, %v906
      %v1025 = vadd.f32 %v748, %v911
      %v1026 = vadd.f32 %v751, %v914
      %v1027 = vadd.f32 %v756, %v919
      %v1028 = vadd.f32 %v759, %v922
      %v1029 = vadd.f32 %v764, %v927
      %v1030 = vadd.f32 %v767, %v930
      %v1031 = vadd.f32 %v772, %v935
      %v1032 = vadd.f32 %v775, %v938
      %v1033 = vadd.f32 %v780, %v943
      %v1034 = vadd.f32 %v783, %v946
      %v1035 = vadd.f32 %v788, %v951
      %v1036 = vadd.f32 %v791, %v954
      %v1037 = vadd.f32 %v796, %v959
      %v1038 = vadd.f32 %v799, %v962
      %v1039 = vadd.f32 %v804, %v967
      %v1040 = vadd.f32 %v807, %v970
      %v1041 = vadd.f32 %v812, %v975
      %v1042 = vadd.f32 %v815, %v978
      %v1043 = vadd.f32 %v820, %v983
      %v1044 = vadd.f32 %v823, %v986
      %v1045 = vadd.f32 %v828, %v991
      %v1046 = vadd.f32 %v831, %v994
      %v1047 = vadd.f32 %v836, %v999
      %v1048 = vadd.f32 %v839, %v1002
      %v1049 = vadd.f32 %v844, %v1007
      %v1050 = vadd.f32 %v847, %v1010
      %s1051 = scalar_lea.vmem %s1, 16
      %v1052 = vld [vmem:[%s1051] sm:$0xf]
      %v1053 = vld [vmem:[%s1051 + $0x4] sm:$0x3]
      %v1056 = vunpack.c.l.b16 %v1052
      %v1057 = vunpack.c.l.b16 %v1053
      %v1058 = vpack.c.b16 %v1057, %v1056
      %v1060 = vsel %vm685, %v1058, 0
      %1062 = vmatprep.subr.bf16.mxu0 0
      %1063 = vmatpush1.bf16.msra.mxu0 %v1060
      %1064 = vmatprep.subr.bf16.mxu0 0
      %1065 = vmatpush1.bf16.msra.mxu0 0
      %1066 = vmatprep.subr.bf16.mxu0 0
      %1067 = vmatpush1.bf16.msra.mxu0 0
      %1068 = vmatprep.subr.bf16.mxu0 0
      %1069 = vmatpush1.bf16.msra.mxu0 0
      %1070 = vmatprep.subr.bf16.mxu0 0
      %1071 = vmatpush1.bf16.msra.mxu0 0
      %1072 = vmatprep.subr.bf16.mxu0 0
      %1073 = vmatpush1.bf16.msra.mxu0 0
      %1074 = vmatprep.subr.bf16.mxu0 0
      %1075 = vmatpush1.bf16.msra.mxu0 0
      %1076 = vmatprep.subr.bf16.mxu0 0
      %1077 = vmatpush1.bf16.msra.mxu0 0
      %1078 = vmatprep.subr.bf16.mxu0 0
      %1079 = vmatpush1.bf16.msra.mxu0 0
      %1080 = vmatprep.subr.bf16.mxu0 0
      %1081 = vmatpush1.bf16.msra.mxu0 0
      %1082 = vmatprep.subr.bf16.mxu0 0
      %1083 = vmatpush1.bf16.msra.mxu0 0
      %1084 = vmatprep.subr.bf16.mxu0 0
      %1085 = vmatpush1.bf16.msra.mxu0 0
      %1086 = vmatprep.subr.bf16.mxu0 0
      %1087 = vmatpush1.bf16.msra.mxu0 0
      %1088 = vmatprep.subr.bf16.mxu0 0
      %1089 = vmatpush1.bf16.msra.mxu0 0
      %1090 = vmatprep.subr.bf16.mxu0 0
      %1091 = vmatpush1.bf16.msra.mxu0 0
      %1092 = vmatprep.subr.bf16.mxu0 0
      %1093 = vmatpush1.bf16.msra.mxu0 0
      %1094 = vmatprep.mubr.bf16.mxu0 0
      %1095 = vmatmul.mubr.bf16.gmra.mrb[0].mxu0 %v653
      %v1096 = vpop.f32.mrb[0].mxu0
      %v1097 = vpop.f32.mrb[0].mxu0
      %v1098 = vpop.f32.mrb[0].mxu0
      %v1099 = vpop.f32.mrb[0].mxu0
      %1100 = vmatprep.mubr.bf16.mxu0 0
      %1101 = vmatmul.mubr.bf16.gmra.mrb[0].mxu0 %v655
      %v1102 = vpop.f32.mrb[0].mxu0
      %v1103 = vadd.f32 0.0, %v1102
      %v1104 = vpop.f32.mrb[0].mxu0
      %v1105 = vpop.f32.mrb[0].mxu0
      %v1106 = vadd.f32 0.0, %v1105
      %v1107 = vpop.f32.mrb[0].mxu0
      %1108 = vmatprep.mubr.bf16.mxu0 0
      %1109 = vmatmul.mubr.bf16.gmra.mrb[0].mxu0 %v657
      %v1110 = vpop.f32.mrb[0].mxu0
      %v1111 = vadd.f32 0.0, %v1110
      %v1112 = vpop.f32.mrb[0].mxu0
      %v1113 = vpop.f32.mrb[0].mxu0
      %v1114 = vadd.f32 0.0, %v1113
      %v1115 = vpop.f32.mrb[0].mxu0
      %1116 = vmatprep.mubr.bf16.mxu0 0
      %1117 = vmatmul.mubr.bf16.gmra.mrb[0].mxu0 %v659
      %v1118 = vpop.f32.mrb[0].mxu0
      %v1119 = vadd.f32 0.0, %v1118
      %v1120 = vpop.f32.mrb[0].mxu0
      %v1121 = vpop.f32.mrb[0].mxu0
      %v1122 = vadd.f32 0.0, %v1121
      %v1123 = vpop.f32.mrb[0].mxu0
      %1124 = vmatprep.mubr.bf16.mxu0 0
      %1125 = vmatmul.mubr.bf16.gmra.mrb[0].mxu0 %v661
      %v1126 = vpop.f32.mrb[0].mxu0
      %v1127 = vadd.f32 0.0, %v1126
      %v1128 = vpop.f32.mrb[0].mxu0
      %v1129 = vpop.f32.mrb[0].mxu0
      %v1130 = vadd.f32 0.0, %v1129
      %v1131 = vpop.f32.mrb[0].mxu0
      %1132 = vmatprep.mubr.bf16.mxu0 0
      %1133 = vmatmul.mubr.bf16.gmra.mrb[0].mxu0 %v663
      %v1134 = vpop.f32.mrb[0].mxu0
      %v1135 = vadd.f32 0.0, %v1134
      %v1136 = vpop.f32.mrb[0].mxu0
      %v1137 = vpop.f32.mrb[0].mxu0
      %v1138 = vadd.f32 0.0, %v1137
      %v1139 = vpop.f32.mrb[0].mxu0
      %1140 = vmatprep.mubr.bf16.mxu0 0
      %1141 = vmatmul.mubr.bf16.gmra.mrb[0].mxu0 %v665
      %v1142 = vpop.f32.mrb[0].mxu0
      %v1143 = vadd.f32 0.0, %v1142
      %v1144 = vpop.f32.mrb[0].mxu0
      %v1145 = vpop.f32.mrb[0].mxu0
      %v1146 = vadd.f32 0.0, %v1145
      %v1147 = vpop.f32.mrb[0].mxu0
      %1148 = vmatprep.mubr.bf16.mxu0 0
      %1149 = vmatmul.mubr.bf16.gmra.mrb[0].mxu0 %v667
      %v1150 = vpop.f32.mrb[0].mxu0
      %v1151 = vadd.f32 0.0, %v1150
      %v1152 = vpop.f32.mrb[0].mxu0
      %v1153 = vpop.f32.mrb[0].mxu0
      %v1154 = vadd.f32 0.0, %v1153
      %v1155 = vpop.f32.mrb[0].mxu0
      %1156 = vmatprep.mubr.bf16.mxu0 0
      %1157 = vmatmul.mubr.bf16.gmra.mrb[0].mxu0 %v669
      %v1158 = vpop.f32.mrb[0].mxu0
      %v1159 = vadd.f32 0.0, %v1158
      %v1160 = vpop.f32.mrb[0].mxu0
      %v1161 = vpop.f32.mrb[0].mxu0
      %v1162 = vadd.f32 0.0, %v1161
      %v1163 = vpop.f32.mrb[0].mxu0
      %1164 = vmatprep.mubr.bf16.mxu0 0
      %1165 = vmatmul.mubr.bf16.gmra.mrb[0].mxu0 %v671
      %v1166 = vpop.f32.mrb[0].mxu0
      %v1167 = vadd.f32 0.0, %v1166
      %v1168 = vpop.f32.mrb[0].mxu0
      %v1169 = vpop.f32.mrb[0].mxu0
      %v1170 = vadd.f32 0.0, %v1169
      %v1171 = vpop.f32.mrb[0].mxu0
      %1172 = vmatprep.mubr.bf16.mxu0 0
      %1173 = vmatmul.mubr.bf16.gmra.mrb[0].mxu0 %v673
      %v1174 = vpop.f32.mrb[0].mxu0
      %v1175 = vadd.f32 0.0, %v1174
      %v1176 = vpop.f32.mrb[0].mxu0
      %v1177 = vpop.f32.mrb[0].mxu0
      %v1178 = vadd.f32 0.0, %v1177
      %v1179 = vpop.f32.mrb[0].mxu0
      %1180 = vmatprep.mubr.bf16.mxu0 0
      %1181 = vmatmul.mubr.bf16.gmra.mrb[0].mxu0 %v675
      %v1182 = vpop.f32.mrb[0].mxu0
      %v1183 = vadd.f32 0.0, %v1182
      %v1184 = vpop.f32.mrb[0].mxu0
      %v1185 = vpop.f32.mrb[0].mxu0
      %v1186 = vadd.f32 0.0, %v1185
      %v1187 = vpop.f32.mrb[0].mxu0
      %1188 = vmatprep.mubr.bf16.mxu0 0
      %1189 = vmatmul.mubr.bf16.gmra.mrb[0].mxu0 %v677
      %v1190 = vpop.f32.mrb[0].mxu0
      %v1191 = vadd.f32 0.0, %v1190
      %v1192 = vpop.f32.mrb[0].mxu0
      %v1193 = vpop.f32.mrb[0].mxu0
      %v1194 = vadd.f32 0.0, %v1193
      %v1195 = vpop.f32.mrb[0].mxu0
      %1196 = vmatprep.mubr.bf16.mxu0 0
      %1197 = vmatmul.mubr.bf16.gmra.mrb[0].mxu0 %v679
      %v1198 = vpop.f32.mrb[0].mxu0
      %v1199 = vadd.f32 0.0, %v1198
      %v1200 = vpop.f32.mrb[0].mxu0
      %v1201 = vpop.f32.mrb[0].mxu0
      %v1202 = vadd.f32 0.0, %v1201
      %v1203 = vpop.f32.mrb[0].mxu0
      %1204 = vmatprep.mubr.bf16.mxu0 0
      %1205 = vmatmul.mubr.bf16.gmra.mrb[0].mxu0 %v681
      %v1206 = vpop.f32.mrb[0].mxu0
      %v1207 = vadd.f32 0.0, %v1206
      %v1208 = vpop.f32.mrb[0].mxu0
      %v1209 = vpop.f32.mrb[0].mxu0
      %v1210 = vadd.f32 0.0, %v1209
      %v1211 = vpop.f32.mrb[0].mxu0
      %1212 = vmatprep.mubr.bf16.mxu0 0
      %1213 = vmatmul.mubr.bf16.gmra.mrb[0].mxu0 %v683
      %v1214 = vpop.f32.mrb[0].mxu0
      %v1215 = vadd.f32 0.0, %v1214
      %v1216 = vpop.f32.mrb[0].mxu0
      %v1217 = vpop.f32.mrb[0].mxu0
      %v1218 = vadd.f32 0.0, %v1217
      %v1219 = vpop.f32.mrb[0].mxu0
      %1220 = vdwg.mxu0
      %v1221 = vadd.f32 %v1019, %v1103
      %v1222 = vadd.f32 %v1020, %v1106
      %v1223 = vadd.f32 %v1021, %v1111
      %v1224 = vadd.f32 %v1022, %v1114
      %v1225 = vadd.f32 %v1023, %v1119
      %v1226 = vadd.f32 %v1024, %v1122
      %v1227 = vadd.f32 %v1025, %v1127
      %v1228 = vadd.f32 %v1026, %v1130
      %v1229 = vadd.f32 %v1027, %v1135
      %v1230 = vadd.f32 %v1028, %v1138
      %v1231 = vadd.f32 %v1029, %v1143
      %v1232 = vadd.f32 %v1030, %v1146
      %v1233 = vadd.f32 %v1031, %v1151
      %v1234 = vadd.f32 %v1032, %v1154
      %v1235 = vadd.f32 %v1033, %v1159
      %v1236 = vadd.f32 %v1034, %v1162
      %v1237 = vadd.f32 %v1035, %v1167
      %v1238 = vadd.f32 %v1036, %v1170
      %v1239 = vadd.f32 %v1037, %v1175
      %v1240 = vadd.f32 %v1038, %v1178
      %v1241 = vadd.f32 %v1039, %v1183
      %v1242 = vadd.f32 %v1040, %v1186
      %v1243 = vadd.f32 %v1041, %v1191
      %v1244 = vadd.f32 %v1042, %v1194
      %v1245 = vadd.f32 %v1043, %v1199
      %v1246 = vadd.f32 %v1044, %v1202
      %v1247 = vadd.f32 %v1045, %v1207
      %v1248 = vadd.f32 %v1046, %v1210
      %v1249 = vadd.f32 %v1047, %v1215
      %v1250 = vadd.f32 %v1048, %v1218
      %v1251 = vadd.f32 %v1049, %v1207
      %v1252 = vadd.f32 %v1050, %v1210
      %v1253 = vsel %vm562, %v1221, 0.0
      %v1254 = vsel %vm562, %v1222, 0.0
      %v1255 = vadd.f32 %v1253, %v1254
      %v1256 = vsel %vm562, %v1223, 0.0
      %v1257 = vadd.f32 %v1255, %v1256
      %v1258 = vsel %vm562, %v1224, 0.0
      %v1259 = vadd.f32 %v1257, %v1258
      %v1260 = vsel %vm562, %v1225, 0.0
      %v1261 = vadd.f32 %v1259, %v1260
      %v1262 = vsel %vm562, %v1226, 0.0
      %v1263 = vadd.f32 %v1261, %v1262
      %v1264 = vsel %vm562, %v1227, 0.0
      %v1265 = vadd.f32 %v1263, %v1264
      %v1266 = vsel %vm562, %v1228, 0.0
      %v1267 = vadd.f32 %v1265, %v1266
      %v1268 = vsel %vm562, %v1229, 0.0
      %v1269 = vadd.f32 %v1267, %v1268
      %v1270 = vsel %vm562, %v1230, 0.0
      %v1271 = vadd.f32 %v1269, %v1270
      %v1272 = vsel %vm562, %v1231, 0.0
      %v1273 = vadd.f32 %v1271, %v1272
      %v1274 = vsel %vm562, %v1232, 0.0
      %v1275 = vadd.f32 %v1273, %v1274
      %v1276 = vsel %vm562, %v1233, 0.0
      %v1277 = vadd.f32 %v1275, %v1276
      %v1278 = vsel %vm562, %v1234, 0.0
      %v1279 = vadd.f32 %v1277, %v1278
      %v1280 = vsel %vm562, %v1235, 0.0
      %v1281 = vadd.f32 %v1279, %v1280
      %v1282 = vsel %vm562, %v1236, 0.0
      %v1283 = vadd.f32 %v1281, %v1282
      %v1284 = vsel %vm562, %v1237, 0.0
      %v1285 = vadd.f32 %v1283, %v1284
      %v1286 = vsel %vm562, %v1238, 0.0
      %v1287 = vadd.f32 %v1285, %v1286
      %v1288 = vsel %vm562, %v1239, 0.0
      %v1289 = vadd.f32 %v1287, %v1288
      %v1290 = vsel %vm562, %v1240, 0.0
      %v1291 = vadd.f32 %v1289, %v1290
      %v1292 = vsel %vm562, %v1241, 0.0
      %v1293 = vadd.f32 %v1291, %v1292
      %v1294 = vsel %vm562, %v1242, 0.0
      %v1295 = vadd.f32 %v1293, %v1294
      %v1296 = vsel %vm562, %v1243, 0.0
      %v1297 = vadd.f32 %v1295, %v1296
      %v1298 = vsel %vm562, %v1244, 0.0
      %v1299 = vadd.f32 %v1297, %v1298
      %v1300 = vsel %vm562, %v1245, 0.0
      %v1301 = vadd.f32 %v1299, %v1300
      %v1302 = vsel %vm562, %v1246, 0.0
      %v1303 = vadd.f32 %v1301, %v1302
      %v1304 = vsel %vm562, %v1247, 0.0
      %v1305 = vadd.f32 %v1303, %v1304
      %v1306 = vsel %vm562, %v1248, 0.0
      %v1307 = vadd.f32 %v1305, %v1306
      %v1308 = vsel %vm562, %v1249, 0.0
      %v1309 = vadd.f32 %v1307, %v1308
      %v1310 = vsel %vm562, %v1250, 0.0
      %v1311 = vadd.f32 %v1309, %v1310
      %v1312 = vsel %vm562, %v1251, 0.0
      %v1313 = vadd.f32 %v1311, %v1312
      %v1314 = vsel %vm562, %v1252, 0.0
      %v1315 = vadd.f32 %v1313, %v1314
      %v1316 = vrot.slane %v1315, 4
      %v1317 = vadd.f32 %v1315, %v1316
      %v1318 = vrot.slane %v1317, 2
      %v1319 = vadd.f32 %v1317, %v1318
      %v1320 = vrot.slane %v1319, 1
      %v1321 = vadd.f32 %v1319, %v1320
      %v1322 = vmul.f32 %v1221, %v1221
      %v1323 = vmul.f32 %v1222, %v1222
      %v1324 = vmul.f32 %v1223, %v1223
      %v1325 = vmul.f32 %v1224, %v1224
      %v1326 = vmul.f32 %v1225, %v1225
      %v1327 = vmul.f32 %v1226, %v1226
      %v1328 = vmul.f32 %v1227, %v1227
      %v1329 = vmul.f32 %v1228, %v1228
      %v1330 = vmul.f32 %v1229, %v1229
      %v1331 = vmul.f32 %v1230, %v1230
      %v1332 = vmul.f32 %v1231, %v1231
      %v1333 = vmul.f32 %v1232, %v1232
      %v1334 = vmul.f32 %v1233, %v1233
      %v1335 = vmul.f32 %v1234, %v1234
      %v1336 = vmul.f32 %v1235, %v1235
      %v1337 = vmul.f32 %v1236, %v1236
      %v1338 = vmul.f32 %v1237, %v1237
      %v1339 = vmul.f32 %v1238, %v1238
      %v1340 = vmul.f32 %v1239, %v1239
      %v1341 = vmul.f32 %v1240, %v1240
      %v1342 = vmul.f32 %v1241, %v1241
      %v1343 = vmul.f32 %v1242, %v1242
      %v1344 = vmul.f32 %v1243, %v1243
      %v1345 = vmul.f32 %v1244, %v1244
      %v1346 = vmul.f32 %v1245, %v1245
      %v1347 = vmul.f32 %v1246, %v1246
      %v1348 = vmul.f32 %v1247, %v1247
      %v1349 = vmul.f32 %v1248, %v1248
      %v1350 = vmul.f32 %v1249, %v1249
      %v1351 = vmul.f32 %v1250, %v1250
      %v1352 = vmul.f32 %v1251, %v1251
      %v1353 = vmul.f32 %v1252, %v1252
      %v1354 = vsel %vm562, %v1322, 0.0
      %v1355 = vsel %vm562, %v1323, 0.0
      %v1356 = vadd.f32 %v1354, %v1355
      %v1357 = vsel %vm562, %v1324, 0.0
      %v1358 = vadd.f32 %v1356, %v1357
      %v1359 = vsel %vm562, %v1325, 0.0
      %v1360 = vadd.f32 %v1358, %v1359
      %v1361 = vsel %vm562, %v1326, 0.0
      %v1362 = vadd.f32 %v1360, %v1361
      %v1363 = vsel %vm562, %v1327, 0.0
      %v1364 = vadd.f32 %v1362, %v1363
      %v1365 = vsel %vm562, %v1328, 0.0
      %v1366 = vadd.f32 %v1364, %v1365
      %v1367 = vsel %vm562, %v1329, 0.0
      %v1368 = vadd.f32 %v1366, %v1367
      %v1369 = vsel %vm562, %v1330, 0.0
      %v1370 = vadd.f32 %v1368, %v1369
      %v1371 = vsel %vm562, %v1331, 0.0
      %v1372 = vadd.f32 %v1370, %v1371
      %v1373 = vsel %vm562, %v1332, 0.0
      %v1374 = vadd.f32 %v1372, %v1373
      %v1375 = vsel %vm562, %v1333, 0.0
      %v1376 = vadd.f32 %v1374, %v1375
      %v1377 = vsel %vm562, %v1334, 0.0
      %v1378 = vadd.f32 %v1376, %v1377
      %v1379 = vsel %vm562, %v1335, 0.0
      %v1380 = vadd.f32 %v1378, %v1379
      %v1381 = vsel %vm562, %v1336, 0.0
      %v1382 = vadd.f32 %v1380, %v1381
      %v1383 = vsel %vm562, %v1337, 0.0
      %v1384 = vadd.f32 %v1382, %v1383
      %v1385 = vsel %vm562, %v1338, 0.0
      %v1386 = vadd.f32 %v1384, %v1385
      %v1387 = vsel %vm562, %v1339, 0.0
      %v1388 = vadd.f32 %v1386, %v1387
      %v1389 = vsel %vm562, %v1340, 0.0
      %v1390 = vadd.f32 %v1388, %v1389
      %v1391 = vsel %vm562, %v1341, 0.0
      %v1392 = vadd.f32 %v1390, %v1391
      %v1393 = vsel %vm562, %v1342, 0.0
      %v1394 = vadd.f32 %v1392, %v1393
      %v1395 = vsel %vm562, %v1343, 0.0
      %v1396 = vadd.f32 %v1394, %v1395
      %v1397 = vsel %vm562, %v1344, 0.0
      %v1398 = vadd.f32 %v1396, %v1397
      %v1399 = vsel %vm562, %v1345, 0.0
      %v1400 = vadd.f32 %v1398, %v1399
      %v1401 = vsel %vm562, %v1346, 0.0
      %v1402 = vadd.f32 %v1400, %v1401
      %v1403 = vsel %vm562, %v1347, 0.0
      %v1404 = vadd.f32 %v1402, %v1403
      %v1405 = vsel %vm562, %v1348, 0.0
      %v1406 = vadd.f32 %v1404, %v1405
      %v1407 = vsel %vm562, %v1349, 0.0
      %v1408 = vadd.f32 %v1406, %v1407
      %v1409 = vsel %vm562, %v1350, 0.0
      %v1410 = vadd.f32 %v1408, %v1409
      %v1411 = vsel %vm562, %v1351, 0.0
      %v1412 = vadd.f32 %v1410, %v1411
      %v1413 = vsel %vm562, %v1352, 0.0
      %v1414 = vadd.f32 %v1412, %v1413
      %v1415 = vsel %vm562, %v1353, 0.0
      %v1416 = vadd.f32 %v1414, %v1415
      %v1417 = vrot.slane %v1416, 4
      %v1418 = vadd.f32 %v1416, %v1417
      %v1419 = vrot.slane %v1418, 2
      %v1420 = vadd.f32 %v1418, %v1419
      %v1421 = vrot.slane %v1420, 1
      %v1422 = vadd.f32 %v1420, %v1421
      %v1423 = vmul.f32 %v1321, 0.00390625
      %v1424 = vmul.f32 %v1422, 0.00390625
      %v1425 = vmul.f32 %v1423, %v1423
      %v1426 = vsub.f32 %v1424, %v1425
      %v1427 = vmax.f32 %v1426, 0.0
      %v1428 = vsub.f32 %v1221, %v1423
      %v1429 = vsub.f32 %v1222, %v1423
      %v1430 = vsub.f32 %v1223, %v1423
      %v1431 = vsub.f32 %v1224, %v1423
      %v1432 = vsub.f32 %v1225, %v1423
      %v1433 = vsub.f32 %v1226, %v1423
      %v1434 = vsub.f32 %v1227, %v1423
      %v1435 = vsub.f32 %v1228, %v1423
      %v1436 = vsub.f32 %v1229, %v1423
      %v1437 = vsub.f32 %v1230, %v1423
      %v1438 = vsub.f32 %v1231, %v1423
      %v1439 = vsub.f32 %v1232, %v1423
      %v1440 = vsub.f32 %v1233, %v1423
      %v1441 = vsub.f32 %v1234, %v1423
      %v1442 = vsub.f32 %v1235, %v1423
      %v1443 = vsub.f32 %v1236, %v1423
      %v1444 = vsub.f32 %v1237, %v1423
      %v1445 = vsub.f32 %v1238, %v1423
      %v1446 = vsub.f32 %v1239, %v1423
      %v1447 = vsub.f32 %v1240, %v1423
      %v1448 = vsub.f32 %v1241, %v1423
      %v1449 = vsub.f32 %v1242, %v1423
      %v1450 = vsub.f32 %v1243, %v1423
      %v1451 = vsub.f32 %v1244, %v1423
      %v1452 = vsub.f32 %v1245, %v1423
      %v1453 = vsub.f32 %v1246, %v1423
      %v1454 = vsub.f32 %v1247, %v1423
      %v1455 = vsub.f32 %v1248, %v1423
      %v1456 = vsub.f32 %v1249, %v1423
      %v1457 = vsub.f32 %v1250, %v1423
      %v1458 = vsub.f32 %v1251, %v1423
      %v1459 = vsub.f32 %v1252, %v1423
      %v1460 = vadd.f32 %v1427, 1e-05
      %v1461 = vrsqrt.pop %v1460
      %v1462 = vmul.f32 %v1428, %v1461
      %v1463 = vmul.f32 %v1429, %v1461
      %v1464 = vmul.f32 %v1430, %v1461
      %v1465 = vmul.f32 %v1431, %v1461
      %v1466 = vmul.f32 %v1432, %v1461
      %v1467 = vmul.f32 %v1433, %v1461
      %v1468 = vmul.f32 %v1434, %v1461
      %v1469 = vmul.f32 %v1435, %v1461
      %v1470 = vmul.f32 %v1436, %v1461
      %v1471 = vmul.f32 %v1437, %v1461
      %v1472 = vmul.f32 %v1438, %v1461
      %v1473 = vmul.f32 %v1439, %v1461
      %v1474 = vmul.f32 %v1440, %v1461
      %v1475 = vmul.f32 %v1441, %v1461
      %v1476 = vmul.f32 %v1442, %v1461
      %v1477 = vmul.f32 %v1443, %v1461
      %v1478 = vmul.f32 %v1444, %v1461
      %v1479 = vmul.f32 %v1445, %v1461
      %v1480 = vmul.f32 %v1446, %v1461
      %v1481 = vmul.f32 %v1447, %v1461
      %v1482 = vmul.f32 %v1448, %v1461
      %v1483 = vmul.f32 %v1449, %v1461
      %v1484 = vmul.f32 %v1450, %v1461
      %v1485 = vmul.f32 %v1451, %v1461
      %v1486 = vmul.f32 %v1452, %v1461
      %v1487 = vmul.f32 %v1453, %v1461
      %v1488 = vmul.f32 %v1454, %v1461
      %v1489 = vmul.f32 %v1455, %v1461
      %v1490 = vmul.f32 %v1456, %v1461
      %v1491 = vmul.f32 %v1457, %v1461
      %v1492 = vmul.f32 %v1458, %v1461
      %v1493 = vmul.f32 %v1459, %v1461
      %v1494 = vmax.f32 %v1462, 0.0
      %v1495 = vmax.f32 %v1463, 0.0
      %v1496 = vmax.f32 %v1464, 0.0
      %v1497 = vmax.f32 %v1465, 0.0
      %v1498 = vmax.f32 %v1466, 0.0
      %v1499 = vmax.f32 %v1467, 0.0
      %v1500 = vmax.f32 %v1468, 0.0
      %v1501 = vmax.f32 %v1469, 0.0
      %v1502 = vmax.f32 %v1470, 0.0
      %v1503 = vmax.f32 %v1471, 0.0
      %v1504 = vmax.f32 %v1472, 0.0
      %v1505 = vmax.f32 %v1473, 0.0
      %v1506 = vmax.f32 %v1474, 0.0
      %v1507 = vmax.f32 %v1475, 0.0
      %v1508 = vmax.f32 %v1476, 0.0
      %v1509 = vmax.f32 %v1477, 0.0
      %v1510 = vmax.f32 %v1478, 0.0
      %v1511 = vmax.f32 %v1479, 0.0
      %v1512 = vmax.f32 %v1480, 0.0
      %v1513 = vmax.f32 %v1481, 0.0
      %v1514 = vmax.f32 %v1482, 0.0
      %v1515 = vmax.f32 %v1483, 0.0
      %v1516 = vmax.f32 %v1484, 0.0
      %v1517 = vmax.f32 %v1485, 0.0
      %v1518 = vmax.f32 %v1486, 0.0
      %v1519 = vmax.f32 %v1487, 0.0
      %v1520 = vmax.f32 %v1488, 0.0
      %v1521 = vmax.f32 %v1489, 0.0
      %v1522 = vmax.f32 %v1490, 0.0
      %v1523 = vmax.f32 %v1491, 0.0
      %v1524 = vmax.f32 %v1492, 0.0
      %v1525 = vmax.f32 %v1493, 0.0
      %v1526 = vpack.c.bf16 %v1495, %v1494
      %v1527 = vpack.c.bf16 %v1497, %v1496
      %v1528 = vpack.c.bf16 %v1499, %v1498
      %v1529 = vpack.c.bf16 %v1501, %v1500
      %v1530 = vpack.c.bf16 %v1503, %v1502
      %v1531 = vpack.c.bf16 %v1505, %v1504
      %v1532 = vpack.c.bf16 %v1507, %v1506
      %v1533 = vpack.c.bf16 %v1509, %v1508
      %v1534 = vpack.c.bf16 %v1511, %v1510
      %v1535 = vpack.c.bf16 %v1513, %v1512
      %v1536 = vpack.c.bf16 %v1515, %v1514
      %v1537 = vpack.c.bf16 %v1517, %v1516
      %v1538 = vpack.c.bf16 %v1519, %v1518
      %v1539 = vpack.c.bf16 %v1521, %v1520
      %v1540 = vpack.c.bf16 %v1523, %v1522
      %v1541 = vpack.c.bf16 %v1525, %v1524
      %v1543 = vshrl.u32 %v1526, 16
      %v1546 = vshrl.u32 %v1527, 16
      %v1549 = vshrl.u32 %v1528, 16
      %v1552 = vshrl.u32 %v1529, 16
      %v1555 = vshrl.u32 %v1530, 16
      %v1558 = vshrl.u32 %v1531, 16
      %v1561 = vshrl.u32 %v1532, 16
      %v1564 = vshrl.u32 %v1533, 16
      %v1567 = vshrl.u32 %v1534, 16
      %v1570 = vshrl.u32 %v1535, 16
      %v1573 = vshrl.u32 %v1536, 16
      %v1576 = vshrl.u32 %v1537, 16
      %v1579 = vshrl.u32 %v1538, 16
      %v1582 = vshrl.u32 %v1539, 16
      %v1585 = vshrl.u32 %v1540, 16
      %v1588 = vshrl.u32 %v1541, 16
      %v1606 = vrot.slane %v1543, 7
      %v1607 = vshll.u32 %v1526, 16
      %v1609 = vor.u32 %v1606, %v1607
      %v1610 = vrot.slane %v1546, 7
      %v1611 = vshll.u32 %v1527, 16
      %v1613 = vor.u32 %v1610, %v1611
      %v1614 = vrot.slane %v1549, 7
      %v1615 = vshll.u32 %v1528, 16
      %v1617 = vor.u32 %v1614, %v1615
      %v1618 = vrot.slane %v1552, 7
      %v1619 = vshll.u32 %v1529, 16
      %v1621 = vor.u32 %v1618, %v1619
      %v1622 = vrot.slane %v1555, 7
      %v1623 = vshll.u32 %v1530, 16
      %v1625 = vor.u32 %v1622, %v1623
      %v1626 = vrot.slane %v1558, 7
      %v1627 = vshll.u32 %v1531, 16
      %v1629 = vor.u32 %v1626, %v1627
      %v1630 = vrot.slane %v1561, 7
      %v1631 = vshll.u32 %v1532, 16
      %v1633 = vor.u32 %v1630, %v1631
      %v1634 = vrot.slane %v1564, 7
      %v1635 = vshll.u32 %v1533, 16
      %v1637 = vor.u32 %v1634, %v1635
      %v1638 = vrot.slane %v1567, 7
      %v1639 = vshll.u32 %v1534, 16
      %v1641 = vor.u32 %v1638, %v1639
      %v1642 = vrot.slane %v1570, 7
      %v1643 = vshll.u32 %v1535, 16
      %v1645 = vor.u32 %v1642, %v1643
      %v1646 = vrot.slane %v1573, 7
      %v1647 = vshll.u32 %v1536, 16
      %v1649 = vor.u32 %v1646, %v1647
      %v1650 = vrot.slane %v1576, 7
      %v1651 = vshll.u32 %v1537, 16
      %v1653 = vor.u32 %v1650, %v1651
      %v1654 = vrot.slane %v1579, 7
      %v1655 = vshll.u32 %v1538, 16
      %v1657 = vor.u32 %v1654, %v1655
      %v1658 = vrot.slane %v1582, 7
      %v1659 = vshll.u32 %v1539, 16
      %v1661 = vor.u32 %v1658, %v1659
      %v1662 = vrot.slane %v1585, 7
      %v1663 = vshll.u32 %v1540, 16
      %v1665 = vor.u32 %v1662, %v1663
      %v1666 = vrot.slane %v1588, 7
      %v1667 = vshll.u32 %v1541, 16
      %v1669 = vor.u32 %v1666, %v1667
      %v1686 = vsel %vm366, %v1543, %v1609
      %v1687 = vsel %vm366, %v1546, %v1613
      %v1688 = vsel %vm366, %v1549, %v1617
      %v1689 = vsel %vm366, %v1552, %v1621
      %v1690 = vsel %vm366, %v1555, %v1625
      %v1691 = vsel %vm366, %v1558, %v1629
      %v1692 = vsel %vm366, %v1561, %v1633
      %v1693 = vsel %vm366, %v1564, %v1637
      %v1694 = vsel %vm366, %v1567, %v1641
      %v1695 = vsel %vm366, %v1570, %v1645
      %v1696 = vsel %vm366, %v1573, %v1649
      %v1697 = vsel %vm366, %v1576, %v1653
      %v1698 = vsel %vm366, %v1579, %v1657
      %v1699 = vsel %vm366, %v1582, %v1661
      %v1700 = vsel %vm366, %v1585, %v1665
      %v1701 = vsel %vm366, %v1588, %v1669
      %v1702 = vrot.slane %v1607, 1
      %v1703 = vor.u32 %v1543, %v1702
      %v1704 = vrot.slane %v1611, 1
      %v1705 = vor.u32 %v1546, %v1704
      %v1706 = vrot.slane %v1615, 1
      %v1707 = vor.u32 %v1549, %v1706
      %v1708 = vrot.slane %v1619, 1
      %v1709 = vor.u32 %v1552, %v1708
      %v1710 = vrot.slane %v1623, 1
      %v1711 = vor.u32 %v1555, %v1710
      %v1712 = vrot.slane %v1627, 1
      %v1713 = vor.u32 %v1558, %v1712
      %v1714 = vrot.slane %v1631, 1
      %v1715 = vor.u32 %v1561, %v1714
      %v1716 = vrot.slane %v1635, 1
      %v1717 = vor.u32 %v1564, %v1716
      %v1718 = vrot.slane %v1639, 1
      %v1719 = vor.u32 %v1567, %v1718
      %v1720 = vrot.slane %v1643, 1
      %v1721 = vor.u32 %v1570, %v1720
      %v1722 = vrot.slane %v1647, 1
      %v1723 = vor.u32 %v1573, %v1722
      %v1724 = vrot.slane %v1651, 1
      %v1725 = vor.u32 %v1576, %v1724
      %v1726 = vrot.slane %v1655, 1
      %v1727 = vor.u32 %v1579, %v1726
      %v1728 = vrot.slane %v1659, 1
      %v1729 = vor.u32 %v1582, %v1728
      %v1730 = vrot.slane %v1663, 1
      %v1731 = vor.u32 %v1585, %v1730
      %v1732 = vrot.slane %v1667, 1
      %v1733 = vor.u32 %v1588, %v1732
      %v1766 = vsel %vm449, %v1703, %v1607
      %v1767 = vsel %vm449, %v1705, %v1611
      %v1768 = vsel %vm449, %v1707, %v1615
      %v1769 = vsel %vm449, %v1709, %v1619
      %v1770 = vsel %vm449, %v1711, %v1623
      %v1771 = vsel %vm449, %v1713, %v1627
      %v1772 = vsel %vm449, %v1715, %v1631
      %v1773 = vsel %vm449, %v1717, %v1635
      %v1774 = vsel %vm449, %v1719, %v1639
      %v1775 = vsel %vm449, %v1721, %v1643
      %v1776 = vsel %vm449, %v1723, %v1647
      %v1777 = vsel %vm449, %v1725, %v1651
      %v1778 = vsel %vm449, %v1727, %v1655
      %v1779 = vsel %vm449, %v1729, %v1659
      %v1780 = vsel %vm449, %v1731, %v1663
      %v1781 = vsel %vm449, %v1733, %v1667
      %1798 = vrot.lane.b32.xlu0 %v1526, 4
      %v1799 = vpop.permute.xlu0 %1798
      %1800 = vrot.lane.b32.xlu0 %v1527, 4
      %v1801 = vpop.permute.xlu0 %1800
      %1802 = vrot.lane.b32.xlu0 %v1528, 4
      %v1803 = vpop.permute.xlu0 %1802
      %1804 = vrot.lane.b32.xlu0 %v1529, 4
      %v1805 = vpop.permute.xlu0 %1804
      %1806 = vrot.lane.b32.xlu0 %v1530, 4
      %v1807 = vpop.permute.xlu0 %1806
      %1808 = vrot.lane.b32.xlu0 %v1531, 4
      %v1809 = vpop.permute.xlu0 %1808
      %1810 = vrot.lane.b32.xlu0 %v1532, 4
      %v1811 = vpop.permute.xlu0 %1810
      %1812 = vrot.lane.b32.xlu0 %v1533, 4
      %v1813 = vpop.permute.xlu0 %1812
      %1814 = vrot.lane.b32.xlu0 %v1534, 4
      %v1815 = vpop.permute.xlu0 %1814
      %1816 = vrot.lane.b32.xlu0 %v1535, 4
      %v1817 = vpop.permute.xlu0 %1816
      %1818 = vrot.lane.b32.xlu0 %v1536, 4
      %v1819 = vpop.permute.xlu0 %1818
      %1820 = vrot.lane.b32.xlu0 %v1537, 4
      %v1821 = vpop.permute.xlu0 %1820
      %1822 = vrot.lane.b32.xlu0 %v1538, 4
      %v1823 = vpop.permute.xlu0 %1822
      %1824 = vrot.lane.b32.xlu0 %v1539, 4
      %v1825 = vpop.permute.xlu0 %1824
      %1826 = vrot.lane.b32.xlu0 %v1540, 4
      %v1827 = vpop.permute.xlu0 %1826
      %1828 = vrot.lane.b32.xlu0 %v1541, 4
      %v1829 = vpop.permute.xlu0 %1828
      %1846 = vrot.lane.b32.xlu0 %v1766, 8
      %v1847 = vpop.permute.xlu0 %1846
      %1848 = vrot.lane.b32.xlu0 %v1767, 8
      %v1849 = vpop.permute.xlu0 %1848
      %1850 = vrot.lane.b32.xlu0 %v1768, 8
      %v1851 = vpop.permute.xlu0 %1850
      %1852 = vrot.lane.b32.xlu0 %v1769, 8
      %v1853 = vpop.permute.xlu0 %1852
      %1854 = vrot.lane.b32.xlu0 %v1770, 8
      %v1855 = vpop.permute.xlu0 %1854
      %1856 = vrot.lane.b32.xlu0 %v1771, 8
      %v1857 = vpop.permute.xlu0 %1856
      %1858 = vrot.lane.b32.xlu0 %v1772, 8
      %v1859 = vpop.permute.xlu0 %1858
      %1860 = vrot.lane.b32.xlu0 %v1773, 8
      %v1861 = vpop.permute.xlu0 %1860
      %1862 = vrot.lane.b32.xlu0 %v1774, 8
      %v1863 = vpop.permute.xlu0 %1862
      %1864 = vrot.lane.b32.xlu0 %v1775, 8
      %v1865 = vpop.permute.xlu0 %1864
      %1866 = vrot.lane.b32.xlu0 %v1776, 8
      %v1867 = vpop.permute.xlu0 %1866
      %1868 = vrot.lane.b32.xlu0 %v1777, 8
      %v1869 = vpop.permute.xlu0 %1868
      %1870 = vrot.lane.b32.xlu0 %v1778, 8
      %v1871 = vpop.permute.xlu0 %1870
      %1872 = vrot.lane.b32.xlu0 %v1779, 8
      %v1873 = vpop.permute.xlu0 %1872
      %1874 = vrot.lane.b32.xlu0 %v1780, 8
      %v1875 = vpop.permute.xlu0 %1874
      %1876 = vrot.lane.b32.xlu0 %v1781, 8
      %v1877 = vpop.permute.xlu0 %1876
      %v1880 = vsel %vm562, %v1686, %v1799
      %v1883 = vsel %vm562, %v1687, %v1801
      %v1886 = vsel %vm562, %v1688, %v1803
      %v1889 = vsel %vm562, %v1689, %v1805
      %v1892 = vsel %vm562, %v1690, %v1807
      %v1895 = vsel %vm562, %v1691, %v1809
      %v1898 = vsel %vm562, %v1692, %v1811
      %v1901 = vsel %vm562, %v1693, %v1813
      %v1904 = vsel %vm562, %v1694, %v1815
      %v1907 = vsel %vm562, %v1695, %v1817
      %v1910 = vsel %vm562, %v1696, %v1819
      %v1913 = vsel %vm562, %v1697, %v1821
      %v1916 = vsel %vm562, %v1698, %v1823
      %v1919 = vsel %vm562, %v1699, %v1825
      %v1922 = vsel %vm562, %v1700, %v1827
      %v1925 = vsel %vm562, %v1701, %v1829
      %v1927 = vsel %vm611, %v1880, %v1847
      %v1929 = vsel %vm611, %v1883, %v1849
      %v1931 = vsel %vm611, %v1886, %v1851
      %v1933 = vsel %vm611, %v1889, %v1853
      %v1935 = vsel %vm611, %v1892, %v1855
      %v1937 = vsel %vm611, %v1895, %v1857
      %v1939 = vsel %vm611, %v1898, %v1859
      %v1941 = vsel %vm611, %v1901, %v1861
      %v1943 = vsel %vm611, %v1904, %v1863
      %v1945 = vsel %vm611, %v1907, %v1865
      %v1947 = vsel %vm611, %v1910, %v1867
      %v1949 = vsel %vm611, %v1913, %v1869
      %v1951 = vsel %vm611, %v1916, %v1871
      %v1953 = vsel %vm611, %v1919, %v1873
      %v1955 = vsel %vm611, %v1922, %v1875
      %v1957 = vsel %vm611, %v1925, %v1877
      %s1958 = scalar_lea.vmem %s2, 8
      %v1959 = vld [vmem:[%s1958] sm:$0xf]
      %v1960 = vld [vmem:[%s1958 + $0x4] sm:$0x3]
      %v1963 = vunpack.c.l.b16 %v1959
      %v1964 = vunpack.c.l.b16 %v1960
      %v1965 = vpack.c.b16 %v1964, %v1963
      %v1966 = vsel %vm652, %v1927, 0
      %v1968 = vsel %vm652, %v1929, 0
      %v1970 = vsel %vm652, %v1931, 0
      %v1972 = vsel %vm652, %v1933, 0
      %v1974 = vsel %vm652, %v1935, 0
      %v1976 = vsel %vm652, %v1937, 0
      %v1978 = vsel %vm652, %v1939, 0
      %v1980 = vsel %vm652, %v1941, 0
      %v1982 = vsel %vm652, %v1943, 0
      %v1984 = vsel %vm652, %v1945, 0
      %v1986 = vsel %vm652, %v1947, 0
      %v1988 = vsel %vm652, %v1949, 0
      %v1990 = vsel %vm652, %v1951, 0
      %v1992 = vsel %vm652, %v1953, 0
      %v1994 = vsel %vm652, %v1955, 0
      %v1996 = vsel %vm652, %v1957, 0
      %v1999 = vsel %vm685, %v1965, 0
      %2001 = vmatprep.subr.bf16.mxu0 0
      %2002 = vmatpush1.bf16.msra.mxu0 %v1999
      %2003 = vmatprep.subr.bf16.mxu0 0
      %2004 = vmatpush1.bf16.msra.mxu0 0
      %2005 = vmatprep.subr.bf16.mxu0 0
      %2006 = vmatpush1.bf16.msra.mxu0 0
      %2007 = vmatprep.subr.bf16.mxu0 0
      %2008 = vmatpush1.bf16.msra.mxu0 0
      %2009 = vmatprep.subr.bf16.mxu0 0
      %2010 = vmatpush1.bf16.msra.mxu0 0
      %2011 = vmatprep.subr.bf16.mxu0 0
      %2012 = vmatpush1.bf16.msra.mxu0 0
      %2013 = vmatprep.subr.bf16.mxu0 0
      %2014 = vmatpush1.bf16.msra.mxu0 0
      %2015 = vmatprep.subr.bf16.mxu0 0
      %2016 = vmatpush1.bf16.msra.mxu0 0
      %2017 = vmatprep.subr.bf16.mxu0 0
      %2018 = vmatpush1.bf16.msra.mxu0 0
      %2019 = vmatprep.subr.bf16.mxu0 0
      %2020 = vmatpush1.bf16.msra.mxu0 0
      %2021 = vmatprep.subr.bf16.mxu0 0
      %2022 = vmatpush1.bf16.msra.mxu0 0
      %2023 = vmatprep.subr.bf16.mxu0 0
      %2024 = vmatpush1.bf16.msra.mxu0 0
      %2025 = vmatprep.subr.bf16.mxu0 0
      %2026 = vmatpush1.bf16.msra.mxu0 0
      %2027 = vmatprep.subr.bf16.mxu0 0
      %2028 = vmatpush1.bf16.msra.mxu0 0
      %2029 = vmatprep.subr.bf16.mxu0 0
      %2030 = vmatpush1.bf16.msra.mxu0 0
      %2031 = vmatprep.subr.bf16.mxu0 0
      %2032 = vmatpush1.bf16.msra.mxu0 0
      %2033 = vmatprep.mubr.bf16.mxu0 0
      %2034 = vmatmul.mubr.bf16.gmra.mrb[0].mxu0 %v1966
      %v2035 = vpop.f32.mrb[0].mxu0
      %v2036 = vadd.f32 0.0, %v2035
      %v2037 = vpop.f32.mrb[0].mxu0
      %v2038 = vpop.f32.mrb[0].mxu0
      %v2039 = vadd.f32 0.0, %v2038
      %v2040 = vpop.f32.mrb[0].mxu0
      %2041 = vmatprep.mubr.bf16.mxu0 0
      %2042 = vmatmul.mubr.bf16.gmra.mrb[0].mxu0 %v1968
      %v2043 = vpop.f32.mrb[0].mxu0
      %v2044 = vadd.f32 0.0, %v2043
      %v2045 = vpop.f32.mrb[0].mxu0
      %v2046 = vpop.f32.mrb[0].mxu0
      %v2047 = vadd.f32 0.0, %v2046
      %v2048 = vpop.f32.mrb[0].mxu0
      %2049 = vmatprep.mubr.bf16.mxu0 0
      %2050 = vmatmul.mubr.bf16.gmra.mrb[0].mxu0 %v1970
      %v2051 = vpop.f32.mrb[0].mxu0
      %v2052 = vadd.f32 0.0, %v2051
      %v2053 = vpop.f32.mrb[0].mxu0
      %v2054 = vpop.f32.mrb[0].mxu0
      %v2055 = vadd.f32 0.0, %v2054
      %v2056 = vpop.f32.mrb[0].mxu0
      %2057 = vmatprep.mubr.bf16.mxu0 0
      %2058 = vmatmul.mubr.bf16.gmra.mrb[0].mxu0 %v1972
      %v2059 = vpop.f32.mrb[0].mxu0
      %v2060 = vadd.f32 0.0, %v2059
      %v2061 = vpop.f32.mrb[0].mxu0
      %v2062 = vpop.f32.mrb[0].mxu0
      %v2063 = vadd.f32 0.0, %v2062
      %v2064 = vpop.f32.mrb[0].mxu0
      %2065 = vmatprep.mubr.bf16.mxu0 0
      %2066 = vmatmul.mubr.bf16.gmra.mrb[0].mxu0 %v1974
      %v2067 = vpop.f32.mrb[0].mxu0
      %v2068 = vadd.f32 0.0, %v2067
      %v2069 = vpop.f32.mrb[0].mxu0
      %v2070 = vpop.f32.mrb[0].mxu0
      %v2071 = vadd.f32 0.0, %v2070
      %v2072 = vpop.f32.mrb[0].mxu0
      %2073 = vmatprep.mubr.bf16.mxu0 0
      %2074 = vmatmul.mubr.bf16.gmra.mrb[0].mxu0 %v1976
      %v2075 = vpop.f32.mrb[0].mxu0
      %v2076 = vadd.f32 0.0, %v2075
      %v2077 = vpop.f32.mrb[0].mxu0
      %v2078 = vpop.f32.mrb[0].mxu0
      %v2079 = vadd.f32 0.0, %v2078
      %v2080 = vpop.f32.mrb[0].mxu0
      %2081 = vmatprep.mubr.bf16.mxu0 0
      %2082 = vmatmul.mubr.bf16.gmra.mrb[0].mxu0 %v1978
      %v2083 = vpop.f32.mrb[0].mxu0
      %v2084 = vadd.f32 0.0, %v2083
      %v2085 = vpop.f32.mrb[0].mxu0
      %v2086 = vpop.f32.mrb[0].mxu0
      %v2087 = vadd.f32 0.0, %v2086
      %v2088 = vpop.f32.mrb[0].mxu0
      %2089 = vmatprep.mubr.bf16.mxu0 0
      %2090 = vmatmul.mubr.bf16.gmra.mrb[0].mxu0 %v1980
      %v2091 = vpop.f32.mrb[0].mxu0
      %v2092 = vadd.f32 0.0, %v2091
      %v2093 = vpop.f32.mrb[0].mxu0
      %v2094 = vpop.f32.mrb[0].mxu0
      %v2095 = vadd.f32 0.0, %v2094
      %v2096 = vpop.f32.mrb[0].mxu0
      %2097 = vmatprep.mubr.bf16.mxu0 0
      %2098 = vmatmul.mubr.bf16.gmra.mrb[0].mxu0 %v1982
      %v2099 = vpop.f32.mrb[0].mxu0
      %v2100 = vadd.f32 0.0, %v2099
      %v2101 = vpop.f32.mrb[0].mxu0
      %v2102 = vpop.f32.mrb[0].mxu0
      %v2103 = vadd.f32 0.0, %v2102
      %v2104 = vpop.f32.mrb[0].mxu0
      %2105 = vmatprep.mubr.bf16.mxu0 0
      %2106 = vmatmul.mubr.bf16.gmra.mrb[0].mxu0 %v1984
      %v2107 = vpop.f32.mrb[0].mxu0
      %v2108 = vadd.f32 0.0, %v2107
      %v2109 = vpop.f32.mrb[0].mxu0
      %v2110 = vpop.f32.mrb[0].mxu0
      %v2111 = vadd.f32 0.0, %v2110
      %v2112 = vpop.f32.mrb[0].mxu0
      %2113 = vmatprep.mubr.bf16.mxu0 0
      %2114 = vmatmul.mubr.bf16.gmra.mrb[0].mxu0 %v1986
      %v2115 = vpop.f32.mrb[0].mxu0
      %v2116 = vadd.f32 0.0, %v2115
      %v2117 = vpop.f32.mrb[0].mxu0
      %v2118 = vpop.f32.mrb[0].mxu0
      %v2119 = vadd.f32 0.0, %v2118
      %v2120 = vpop.f32.mrb[0].mxu0
      %2121 = vmatprep.mubr.bf16.mxu0 0
      %2122 = vmatmul.mubr.bf16.gmra.mrb[0].mxu0 %v1988
      %v2123 = vpop.f32.mrb[0].mxu0
      %v2124 = vadd.f32 0.0, %v2123
      %v2125 = vpop.f32.mrb[0].mxu0
      %v2126 = vpop.f32.mrb[0].mxu0
      %v2127 = vadd.f32 0.0, %v2126
      %v2128 = vpop.f32.mrb[0].mxu0
      %2129 = vmatprep.mubr.bf16.mxu0 0
      %2130 = vmatmul.mubr.bf16.gmra.mrb[0].mxu0 %v1990
      %v2131 = vpop.f32.mrb[0].mxu0
      %v2132 = vadd.f32 0.0, %v2131
      %v2133 = vpop.f32.mrb[0].mxu0
      %v2134 = vpop.f32.mrb[0].mxu0
      %v2135 = vadd.f32 0.0, %v2134
      %v2136 = vpop.f32.mrb[0].mxu0
      %2137 = vmatprep.mubr.bf16.mxu0 0
      %2138 = vmatmul.mubr.bf16.gmra.mrb[0].mxu0 %v1992
      %v2139 = vpop.f32.mrb[0].mxu0
      %v2140 = vadd.f32 0.0, %v2139
      %v2141 = vpop.f32.mrb[0].mxu0
      %v2142 = vpop.f32.mrb[0].mxu0
      %v2143 = vadd.f32 0.0, %v2142
      %v2144 = vpop.f32.mrb[0].mxu0
      %2145 = vmatprep.mubr.bf16.mxu0 0
      %2146 = vmatmul.mubr.bf16.gmra.mrb[0].mxu0 %v1994
      %v2147 = vpop.f32.mrb[0].mxu0
      %v2148 = vadd.f32 0.0, %v2147
      %v2149 = vpop.f32.mrb[0].mxu0
      %v2150 = vpop.f32.mrb[0].mxu0
      %v2151 = vadd.f32 0.0, %v2150
      %v2152 = vpop.f32.mrb[0].mxu0
      %2153 = vmatprep.mubr.bf16.mxu0 0
      %2154 = vmatmul.mubr.bf16.gmra.mrb[0].mxu0 %v1996
      %v2155 = vpop.f32.mrb[0].mxu0
      %v2156 = vadd.f32 0.0, %v2155
      %v2157 = vpop.f32.mrb[0].mxu0
      %v2158 = vpop.f32.mrb[0].mxu0
      %v2159 = vadd.f32 0.0, %v2158
      %v2160 = vpop.f32.mrb[0].mxu0
      %2161 = vdwg.mxu0
      %v2162 = vld [vmem:[%s2] sm:$0xf]
      %v2163 = vld [vmem:[%s2 + $0x4] sm:$0x3]
      %v2166 = vunpack.c.l.b16 %v2162
      %v2167 = vunpack.c.l.b16 %v2163
      %v2168 = vpack.c.b16 %v2167, %v2166
      %v2170 = vsel %vm685, %v2168, 0
      %2172 = vmatprep.subr.bf16.mxu0 0
      %2173 = vmatpush1.bf16.msra.mxu0 %v2170
      %2174 = vmatprep.subr.bf16.mxu0 0
      %2175 = vmatpush1.bf16.msra.mxu0 0
      %2176 = vmatprep.subr.bf16.mxu0 0
      %2177 = vmatpush1.bf16.msra.mxu0 0
      %2178 = vmatprep.subr.bf16.mxu0 0
      %2179 = vmatpush1.bf16.msra.mxu0 0
      %2180 = vmatprep.subr.bf16.mxu0 0
      %2181 = vmatpush1.bf16.msra.mxu0 0
      %2182 = vmatprep.subr.bf16.mxu0 0
      %2183 = vmatpush1.bf16.msra.mxu0 0
      %2184 = vmatprep.subr.bf16.mxu0 0
      %2185 = vmatpush1.bf16.msra.mxu0 0
      %2186 = vmatprep.subr.bf16.mxu0 0
      %2187 = vmatpush1.bf16.msra.mxu0 0
      %2188 = vmatprep.subr.bf16.mxu0 0
      %2189 = vmatpush1.bf16.msra.mxu0 0
      %2190 = vmatprep.subr.bf16.mxu0 0
      %2191 = vmatpush1.bf16.msra.mxu0 0
      %2192 = vmatprep.subr.bf16.mxu0 0
      %2193 = vmatpush1.bf16.msra.mxu0 0
      %2194 = vmatprep.subr.bf16.mxu0 0
      %2195 = vmatpush1.bf16.msra.mxu0 0
      %2196 = vmatprep.subr.bf16.mxu0 0
      %2197 = vmatpush1.bf16.msra.mxu0 0
      %2198 = vmatprep.subr.bf16.mxu0 0
      %2199 = vmatpush1.bf16.msra.mxu0 0
      %2200 = vmatprep.subr.bf16.mxu0 0
      %2201 = vmatpush1.bf16.msra.mxu0 0
      %2202 = vmatprep.subr.bf16.mxu0 0
      %2203 = vmatpush1.bf16.msra.mxu0 0
      %2204 = vmatprep.mubr.bf16.mxu0 0
      %2205 = vmatmul.mubr.bf16.gmra.mrb[0].mxu0 %v1966
      %v2206 = vpop.f32.mrb[0].mxu0
      %v2207 = vadd.f32 0.0, %v2206
      %v2208 = vpop.f32.mrb[0].mxu0
      %v2209 = vpop.f32.mrb[0].mxu0
      %v2210 = vadd.f32 0.0, %v2209
      %v2211 = vpop.f32.mrb[0].mxu0
      %2212 = vmatprep.mubr.bf16.mxu0 0
      %2213 = vmatmul.mubr.bf16.gmra.mrb[0].mxu0 %v1968
      %v2214 = vpop.f32.mrb[0].mxu0
      %v2215 = vadd.f32 0.0, %v2214
      %v2216 = vpop.f32.mrb[0].mxu0
      %v2217 = vpop.f32.mrb[0].mxu0
      %v2218 = vadd.f32 0.0, %v2217
      %v2219 = vpop.f32.mrb[0].mxu0
      %2220 = vmatprep.mubr.bf16.mxu0 0
      %2221 = vmatmul.mubr.bf16.gmra.mrb[0].mxu0 %v1970
      %v2222 = vpop.f32.mrb[0].mxu0
      %v2223 = vadd.f32 0.0, %v2222
      %v2224 = vpop.f32.mrb[0].mxu0
      %v2225 = vpop.f32.mrb[0].mxu0
      %v2226 = vadd.f32 0.0, %v2225
      %v2227 = vpop.f32.mrb[0].mxu0
      %2228 = vmatprep.mubr.bf16.mxu0 0
      %2229 = vmatmul.mubr.bf16.gmra.mrb[0].mxu0 %v1972
      %v2230 = vpop.f32.mrb[0].mxu0
      %v2231 = vadd.f32 0.0, %v2230
      %v2232 = vpop.f32.mrb[0].mxu0
      %v2233 = vpop.f32.mrb[0].mxu0
      %v2234 = vadd.f32 0.0, %v2233
      %v2235 = vpop.f32.mrb[0].mxu0
      %2236 = vmatprep.mubr.bf16.mxu0 0
      %2237 = vmatmul.mubr.bf16.gmra.mrb[0].mxu0 %v1974
      %v2238 = vpop.f32.mrb[0].mxu0
      %v2239 = vadd.f32 0.0, %v2238
      %v2240 = vpop.f32.mrb[0].mxu0
      %v2241 = vpop.f32.mrb[0].mxu0
      %v2242 = vadd.f32 0.0, %v2241
      %v2243 = vpop.f32.mrb[0].mxu0
      %2244 = vmatprep.mubr.bf16.mxu0 0
      %2245 = vmatmul.mubr.bf16.gmra.mrb[0].mxu0 %v1976
      %v2246 = vpop.f32.mrb[0].mxu0
      %v2247 = vadd.f32 0.0, %v2246
      %v2248 = vpop.f32.mrb[0].mxu0
      %v2249 = vpop.f32.mrb[0].mxu0
      %v2250 = vadd.f32 0.0, %v2249
      %v2251 = vpop.f32.mrb[0].mxu0
      %2252 = vmatprep.mubr.bf16.mxu0 0
      %2253 = vmatmul.mubr.bf16.gmra.mrb[0].mxu0 %v1978
      %v2254 = vpop.f32.mrb[0].mxu0
      %v2255 = vadd.f32 0.0, %v2254
      %v2256 = vpop.f32.mrb[0].mxu0
      %v2257 = vpop.f32.mrb[0].mxu0
      %v2258 = vadd.f32 0.0, %v2257
      %v2259 = vpop.f32.mrb[0].mxu0
      %2260 = vmatprep.mubr.bf16.mxu0 0
      %2261 = vmatmul.mubr.bf16.gmra.mrb[0].mxu0 %v1980
      %v2262 = vpop.f32.mrb[0].mxu0
      %v2263 = vadd.f32 0.0, %v2262
      %v2264 = vpop.f32.mrb[0].mxu0
      %v2265 = vpop.f32.mrb[0].mxu0
      %v2266 = vadd.f32 0.0, %v2265
      %v2267 = vpop.f32.mrb[0].mxu0
      %2268 = vmatprep.mubr.bf16.mxu0 0
      %2269 = vmatmul.mubr.bf16.gmra.mrb[0].mxu0 %v1982
      %v2270 = vpop.f32.mrb[0].mxu0
      %v2271 = vadd.f32 0.0, %v2270
      %v2272 = vpop.f32.mrb[0].mxu0
      %v2273 = vpop.f32.mrb[0].mxu0
      %v2274 = vadd.f32 0.0, %v2273
      %v2275 = vpop.f32.mrb[0].mxu0
      %2276 = vmatprep.mubr.bf16.mxu0 0
      %2277 = vmatmul.mubr.bf16.gmra.mrb[0].mxu0 %v1984
      %v2278 = vpop.f32.mrb[0].mxu0
      %v2279 = vadd.f32 0.0, %v2278
      %v2280 = vpop.f32.mrb[0].mxu0
      %v2281 = vpop.f32.mrb[0].mxu0
      %v2282 = vadd.f32 0.0, %v2281
      %v2283 = vpop.f32.mrb[0].mxu0
      %2284 = vmatprep.mubr.bf16.mxu0 0
      %2285 = vmatmul.mubr.bf16.gmra.mrb[0].mxu0 %v1986
      %v2286 = vpop.f32.mrb[0].mxu0
      %v2287 = vadd.f32 0.0, %v2286
      %v2288 = vpop.f32.mrb[0].mxu0
      %v2289 = vpop.f32.mrb[0].mxu0
      %v2290 = vadd.f32 0.0, %v2289
      %v2291 = vpop.f32.mrb[0].mxu0
      %2292 = vmatprep.mubr.bf16.mxu0 0
      %2293 = vmatmul.mubr.bf16.gmra.mrb[0].mxu0 %v1988
      %v2294 = vpop.f32.mrb[0].mxu0
      %v2295 = vadd.f32 0.0, %v2294
      %v2296 = vpop.f32.mrb[0].mxu0
      %v2297 = vpop.f32.mrb[0].mxu0
      %v2298 = vadd.f32 0.0, %v2297
      %v2299 = vpop.f32.mrb[0].mxu0
      %2300 = vmatprep.mubr.bf16.mxu0 0
      %2301 = vmatmul.mubr.bf16.gmra.mrb[0].mxu0 %v1990
      %v2302 = vpop.f32.mrb[0].mxu0
      %v2303 = vadd.f32 0.0, %v2302
      %v2304 = vpop.f32.mrb[0].mxu0
      %v2305 = vpop.f32.mrb[0].mxu0
      %v2306 = vadd.f32 0.0, %v2305
      %v2307 = vpop.f32.mrb[0].mxu0
      %2308 = vmatprep.mubr.bf16.mxu0 0
      %2309 = vmatmul.mubr.bf16.gmra.mrb[0].mxu0 %v1992
      %v2310 = vpop.f32.mrb[0].mxu0
      %v2311 = vadd.f32 0.0, %v2310
      %v2312 = vpop.f32.mrb[0].mxu0
      %v2313 = vpop.f32.mrb[0].mxu0
      %v2314 = vadd.f32 0.0, %v2313
      %v2315 = vpop.f32.mrb[0].mxu0
      %2316 = vmatprep.mubr.bf16.mxu0 0
      %2317 = vmatmul.mubr.bf16.gmra.mrb[0].mxu0 %v1994
      %v2318 = vpop.f32.mrb[0].mxu0
      %v2319 = vadd.f32 0.0, %v2318
      %v2320 = vpop.f32.mrb[0].mxu0
      %v2321 = vpop.f32.mrb[0].mxu0
      %v2322 = vadd.f32 0.0, %v2321
      %v2323 = vpop.f32.mrb[0].mxu0
      %2324 = vmatprep.mubr.bf16.mxu0 0
      %2325 = vmatmul.mubr.bf16.gmra.mrb[0].mxu0 %v1996
      %v2326 = vpop.f32.mrb[0].mxu0
      %v2327 = vpop.f32.mrb[0].mxu0
      %v2328 = vpop.f32.mrb[0].mxu0
      %v2329 = vpop.f32.mrb[0].mxu0
      %2330 = vdwg.mxu0
      %v2331 = vadd.f32 %v2036, %v2215
      %v2332 = vadd.f32 %v2039, %v2218
      %v2333 = vadd.f32 %v2044, %v2207
      %v2334 = vadd.f32 %v2047, %v2210
      %v2335 = vadd.f32 %v2052, %v2215
      %v2336 = vadd.f32 %v2055, %v2218
      %v2337 = vadd.f32 %v2060, %v2223
      %v2338 = vadd.f32 %v2063, %v2226
      %v2339 = vadd.f32 %v2068, %v2231
      %v2340 = vadd.f32 %v2071, %v2234
      %v2341 = vadd.f32 %v2076, %v2239
      %v2342 = vadd.f32 %v2079, %v2242
      %v2343 = vadd.f32 %v2084, %v2247
      %v2344 = vadd.f32 %v2087, %v2250
      %v2345 = vadd.f32 %v2092, %v2255
      %v2346 = vadd.f32 %v2095, %v2258
      %v2347 = vadd.f32 %v2100, %v2263
      %v2348 = vadd.f32 %v2103, %v2266
      %v2349 = vadd.f32 %v2108, %v2271
      %v2350 = vadd.f32 %v2111, %v2274
      %v2351 = vadd.f32 %v2116, %v2279
      %v2352 = vadd.f32 %v2119, %v2282
      %v2353 = vadd.f32 %v2124, %v2287
      %v2354 = vadd.f32 %v2127, %v2290
      %v2355 = vadd.f32 %v2132, %v2295
      %v2356 = vadd.f32 %v2135, %v2298
      %v2357 = vadd.f32 %v2140, %v2303
      %v2358 = vadd.f32 %v2143, %v2306
      %v2359 = vadd.f32 %v2148, %v2311
      %v2360 = vadd.f32 %v2151, %v2314
      %v2361 = vadd.f32 %v2156, %v2319
      %v2362 = vadd.f32 %v2159, %v2322
      %s2363 = scalar_lea.vmem %s2, 16
      %v2364 = vld [vmem:[%s2363] sm:$0xf]
      %v2365 = vld [vmem:[%s2363 + $0x4] sm:$0x3]
      %v2368 = vunpack.c.l.b16 %v2364
      %v2369 = vunpack.c.l.b16 %v2365
      %v2370 = vpack.c.b16 %v2369, %v2368
      %v2372 = vsel %vm685, %v2370, 0
      %2374 = vmatprep.subr.bf16.mxu0 0
      %2375 = vmatpush1.bf16.msra.mxu0 %v2372
      %2376 = vmatprep.subr.bf16.mxu0 0
      %2377 = vmatpush1.bf16.msra.mxu0 0
      %2378 = vmatprep.subr.bf16.mxu0 0
      %2379 = vmatpush1.bf16.msra.mxu0 0
      %2380 = vmatprep.subr.bf16.mxu0 0
      %2381 = vmatpush1.bf16.msra.mxu0 0
      %2382 = vmatprep.subr.bf16.mxu0 0
      %2383 = vmatpush1.bf16.msra.mxu0 0
      %2384 = vmatprep.subr.bf16.mxu0 0
      %2385 = vmatpush1.bf16.msra.mxu0 0
      %2386 = vmatprep.subr.bf16.mxu0 0
      %2387 = vmatpush1.bf16.msra.mxu0 0
      %2388 = vmatprep.subr.bf16.mxu0 0
      %2389 = vmatpush1.bf16.msra.mxu0 0
      %2390 = vmatprep.subr.bf16.mxu0 0
      %2391 = vmatpush1.bf16.msra.mxu0 0
      %2392 = vmatprep.subr.bf16.mxu0 0
      %2393 = vmatpush1.bf16.msra.mxu0 0
      %2394 = vmatprep.subr.bf16.mxu0 0
      %2395 = vmatpush1.bf16.msra.mxu0 0
      %2396 = vmatprep.subr.bf16.mxu0 0
      %2397 = vmatpush1.bf16.msra.mxu0 0
      %2398 = vmatprep.subr.bf16.mxu0 0
      %2399 = vmatpush1.bf16.msra.mxu0 0
      %2400 = vmatprep.subr.bf16.mxu0 0
      %2401 = vmatpush1.bf16.msra.mxu0 0
      %2402 = vmatprep.subr.bf16.mxu0 0
      %2403 = vmatpush1.bf16.msra.mxu0 0
      %2404 = vmatprep.subr.bf16.mxu0 0
      %2405 = vmatpush1.bf16.msra.mxu0 0
      %2406 = vmatprep.mubr.bf16.mxu0 0
      %2407 = vmatmul.mubr.bf16.gmra.mrb[0].mxu0 %v1966
      %v2408 = vpop.f32.mrb[0].mxu0
      %v2409 = vpop.f32.mrb[0].mxu0
      %v2410 = vpop.f32.mrb[0].mxu0
      %v2411 = vpop.f32.mrb[0].mxu0
      %2412 = vmatprep.mubr.bf16.mxu0 0
      %2413 = vmatmul.mubr.bf16.gmra.mrb[0].mxu0 %v1968
      %v2414 = vpop.f32.mrb[0].mxu0
      %v2415 = vadd.f32 0.0, %v2414
      %v2416 = vpop.f32.mrb[0].mxu0
      %v2417 = vpop.f32.mrb[0].mxu0
      %v2418 = vadd.f32 0.0, %v2417
      %v2419 = vpop.f32.mrb[0].mxu0
      %2420 = vmatprep.mubr.bf16.mxu0 0
      %2421 = vmatmul.mubr.bf16.gmra.mrb[0].mxu0 %v1970
      %v2422 = vpop.f32.mrb[0].mxu0
      %v2423 = vadd.f32 0.0, %v2422
      %v2424 = vpop.f32.mrb[0].mxu0
      %v2425 = vpop.f32.mrb[0].mxu0
      %v2426 = vadd.f32 0.0, %v2425
      %v2427 = vpop.f32.mrb[0].mxu0
      %2428 = vmatprep.mubr.bf16.mxu0 0
      %2429 = vmatmul.mubr.bf16.gmra.mrb[0].mxu0 %v1972
      %v2430 = vpop.f32.mrb[0].mxu0
      %v2431 = vadd.f32 0.0, %v2430
      %v2432 = vpop.f32.mrb[0].mxu0
      %v2433 = vpop.f32.mrb[0].mxu0
      %v2434 = vadd.f32 0.0, %v2433
      %v2435 = vpop.f32.mrb[0].mxu0
      %2436 = vmatprep.mubr.bf16.mxu0 0
      %2437 = vmatmul.mubr.bf16.gmra.mrb[0].mxu0 %v1974
      %v2438 = vpop.f32.mrb[0].mxu0
      %v2439 = vadd.f32 0.0, %v2438
      %v2440 = vpop.f32.mrb[0].mxu0
      %v2441 = vpop.f32.mrb[0].mxu0
      %v2442 = vadd.f32 0.0, %v2441
      %v2443 = vpop.f32.mrb[0].mxu0
      %2444 = vmatprep.mubr.bf16.mxu0 0
      %2445 = vmatmul.mubr.bf16.gmra.mrb[0].mxu0 %v1976
      %v2446 = vpop.f32.mrb[0].mxu0
      %v2447 = vadd.f32 0.0, %v2446
      %v2448 = vpop.f32.mrb[0].mxu0
      %v2449 = vpop.f32.mrb[0].mxu0
      %v2450 = vadd.f32 0.0, %v2449
      %v2451 = vpop.f32.mrb[0].mxu0
      %2452 = vmatprep.mubr.bf16.mxu0 0
      %2453 = vmatmul.mubr.bf16.gmra.mrb[0].mxu0 %v1978
      %v2454 = vpop.f32.mrb[0].mxu0
      %v2455 = vadd.f32 0.0, %v2454
      %v2456 = vpop.f32.mrb[0].mxu0
      %v2457 = vpop.f32.mrb[0].mxu0
      %v2458 = vadd.f32 0.0, %v2457
      %v2459 = vpop.f32.mrb[0].mxu0
      %2460 = vmatprep.mubr.bf16.mxu0 0
      %2461 = vmatmul.mubr.bf16.gmra.mrb[0].mxu0 %v1980
      %v2462 = vpop.f32.mrb[0].mxu0
      %v2463 = vadd.f32 0.0, %v2462
      %v2464 = vpop.f32.mrb[0].mxu0
      %v2465 = vpop.f32.mrb[0].mxu0
      %v2466 = vadd.f32 0.0, %v2465
      %v2467 = vpop.f32.mrb[0].mxu0
      %2468 = vmatprep.mubr.bf16.mxu0 0
      %2469 = vmatmul.mubr.bf16.gmra.mrb[0].mxu0 %v1982
      %v2470 = vpop.f32.mrb[0].mxu0
      %v2471 = vadd.f32 0.0, %v2470
      %v2472 = vpop.f32.mrb[0].mxu0
      %v2473 = vpop.f32.mrb[0].mxu0
      %v2474 = vadd.f32 0.0, %v2473
      %v2475 = vpop.f32.mrb[0].mxu0
      %2476 = vmatprep.mubr.bf16.mxu0 0
      %2477 = vmatmul.mubr.bf16.gmra.mrb[0].mxu0 %v1984
      %v2478 = vpop.f32.mrb[0].mxu0
      %v2479 = vadd.f32 0.0, %v2478
      %v2480 = vpop.f32.mrb[0].mxu0
      %v2481 = vpop.f32.mrb[0].mxu0
      %v2482 = vadd.f32 0.0, %v2481
      %v2483 = vpop.f32.mrb[0].mxu0
      %2484 = vmatprep.mubr.bf16.mxu0 0
      %2485 = vmatmul.mubr.bf16.gmra.mrb[0].mxu0 %v1986
      %v2486 = vpop.f32.mrb[0].mxu0
      %v2487 = vadd.f32 0.0, %v2486
      %v2488 = vpop.f32.mrb[0].mxu0
      %v2489 = vpop.f32.mrb[0].mxu0
      %v2490 = vadd.f32 0.0, %v2489
      %v2491 = vpop.f32.mrb[0].mxu0
      %2492 = vmatprep.mubr.bf16.mxu0 0
      %2493 = vmatmul.mubr.bf16.gmra.mrb[0].mxu0 %v1988
      %v2494 = vpop.f32.mrb[0].mxu0
      %v2495 = vadd.f32 0.0, %v2494
      %v2496 = vpop.f32.mrb[0].mxu0
      %v2497 = vpop.f32.mrb[0].mxu0
      %v2498 = vadd.f32 0.0, %v2497
      %v2499 = vpop.f32.mrb[0].mxu0
      %2500 = vmatprep.mubr.bf16.mxu0 0
      %2501 = vmatmul.mubr.bf16.gmra.mrb[0].mxu0 %v1990
      %v2502 = vpop.f32.mrb[0].mxu0
      %v2503 = vadd.f32 0.0, %v2502
      %v2504 = vpop.f32.mrb[0].mxu0
      %v2505 = vpop.f32.mrb[0].mxu0
      %v2506 = vadd.f32 0.0, %v2505
      %v2507 = vpop.f32.mrb[0].mxu0
      %2508 = vmatprep.mubr.bf16.mxu0 0
      %2509 = vmatmul.mubr.bf16.gmra.mrb[0].mxu0 %v1992
      %v2510 = vpop.f32.mrb[0].mxu0
      %v2511 = vadd.f32 0.0, %v2510
      %v2512 = vpop.f32.mrb[0].mxu0
      %v2513 = vpop.f32.mrb[0].mxu0
      %v2514 = vadd.f32 0.0, %v2513
      %v2515 = vpop.f32.mrb[0].mxu0
      %2516 = vmatprep.mubr.bf16.mxu0 0
      %2517 = vmatmul.mubr.bf16.gmra.mrb[0].mxu0 %v1994
      %v2518 = vpop.f32.mrb[0].mxu0
      %v2519 = vadd.f32 0.0, %v2518
      %v2520 = vpop.f32.mrb[0].mxu0
      %v2521 = vpop.f32.mrb[0].mxu0
      %v2522 = vadd.f32 0.0, %v2521
      %v2523 = vpop.f32.mrb[0].mxu0
      %2524 = vmatprep.mubr.bf16.mxu0 0
      %2525 = vmatmul.mubr.bf16.gmra.mrb[0].mxu0 %v1996
      %v2526 = vpop.f32.mrb[0].mxu0
      %v2527 = vadd.f32 0.0, %v2526
      %v2528 = vpop.f32.mrb[0].mxu0
      %v2529 = vpop.f32.mrb[0].mxu0
      %v2530 = vadd.f32 0.0, %v2529
      %v2531 = vpop.f32.mrb[0].mxu0
      %2532 = vdwg.mxu0
      %v2533 = vadd.f32 %v2331, %v2415
      %v2534 = vadd.f32 %v2332, %v2418
      %v2535 = vadd.f32 %v2333, %v2423
      %v2536 = vadd.f32 %v2334, %v2426
      %v2537 = vadd.f32 %v2335, %v2431
      %v2538 = vadd.f32 %v2336, %v2434
      %v2539 = vadd.f32 %v2337, %v2439
      %v2540 = vadd.f32 %v2338, %v2442
      %v2541 = vadd.f32 %v2339, %v2447
      %v2542 = vadd.f32 %v2340, %v2450
      %v2543 = vadd.f32 %v2341, %v2455
      %v2544 = vadd.f32 %v2342, %v2458
      %v2545 = vadd.f32 %v2343, %v2463
      %v2546 = vadd.f32 %v2344, %v2466
      %v2547 = vadd.f32 %v2345, %v2471
      %v2548 = vadd.f32 %v2346, %v2474
      %v2549 = vadd.f32 %v2347, %v2479
      %v2550 = vadd.f32 %v2348, %v2482
      %v2551 = vadd.f32 %v2349, %v2487
      %v2552 = vadd.f32 %v2350, %v2490
      %v2553 = vadd.f32 %v2351, %v2495
      %v2554 = vadd.f32 %v2352, %v2498
      %v2555 = vadd.f32 %v2353, %v2503
      %v2556 = vadd.f32 %v2354, %v2506
      %v2557 = vadd.f32 %v2355, %v2511
      %v2558 = vadd.f32 %v2356, %v2514
      %v2559 = vadd.f32 %v2357, %v2519
      %v2560 = vadd.f32 %v2358, %v2522
      %v2561 = vadd.f32 %v2359, %v2527
      %v2562 = vadd.f32 %v2360, %v2530
      %v2563 = vadd.f32 %v2361, %v2519
      %v2564 = vadd.f32 %v2362, %v2522
      %v2565 = vsel %vm562, %v2533, 0.0
      %v2566 = vsel %vm562, %v2534, 0.0
      %v2567 = vadd.f32 %v2565, %v2566
      %v2568 = vsel %vm562, %v2535, 0.0
      %v2569 = vadd.f32 %v2567, %v2568
      %v2570 = vsel %vm562, %v2536, 0.0
      %v2571 = vadd.f32 %v2569, %v2570
      %v2572 = vsel %vm562, %v2537, 0.0
      %v2573 = vadd.f32 %v2571, %v2572
      %v2574 = vsel %vm562, %v2538, 0.0
      %v2575 = vadd.f32 %v2573, %v2574
      %v2576 = vsel %vm562, %v2539, 0.0
      %v2577 = vadd.f32 %v2575, %v2576
      %v2578 = vsel %vm562, %v2540, 0.0
      %v2579 = vadd.f32 %v2577, %v2578
      %v2580 = vsel %vm562, %v2541, 0.0
      %v2581 = vadd.f32 %v2579, %v2580
      %v2582 = vsel %vm562, %v2542, 0.0
      %v2583 = vadd.f32 %v2581, %v2582
      %v2584 = vsel %vm562, %v2543, 0.0
      %v2585 = vadd.f32 %v2583, %v2584
      %v2586 = vsel %vm562, %v2544, 0.0
      %v2587 = vadd.f32 %v2585, %v2586
      %v2588 = vsel %vm562, %v2545, 0.0
      %v2589 = vadd.f32 %v2587, %v2588
      %v2590 = vsel %vm562, %v2546, 0.0
      %v2591 = vadd.f32 %v2589, %v2590
      %v2592 = vsel %vm562, %v2547, 0.0
      %v2593 = vadd.f32 %v2591, %v2592
      %v2594 = vsel %vm562, %v2548, 0.0
      %v2595 = vadd.f32 %v2593, %v2594
      %v2596 = vsel %vm562, %v2549, 0.0
      %v2597 = vadd.f32 %v2595, %v2596
      %v2598 = vsel %vm562, %v2550, 0.0
      %v2599 = vadd.f32 %v2597, %v2598
      %v2600 = vsel %vm562, %v2551, 0.0
      %v2601 = vadd.f32 %v2599, %v2600
      %v2602 = vsel %vm562, %v2552, 0.0
      %v2603 = vadd.f32 %v2601, %v2602
      %v2604 = vsel %vm562, %v2553, 0.0
      %v2605 = vadd.f32 %v2603, %v2604
      %v2606 = vsel %vm562, %v2554, 0.0
      %v2607 = vadd.f32 %v2605, %v2606
      %v2608 = vsel %vm562, %v2555, 0.0
      %v2609 = vadd.f32 %v2607, %v2608
      %v2610 = vsel %vm562, %v2556, 0.0
      %v2611 = vadd.f32 %v2609, %v2610
      %v2612 = vsel %vm562, %v2557, 0.0
      %v2613 = vadd.f32 %v2611, %v2612
      %v2614 = vsel %vm562, %v2558, 0.0
      %v2615 = vadd.f32 %v2613, %v2614
      %v2616 = vsel %vm562, %v2559, 0.0
      %v2617 = vadd.f32 %v2615, %v2616
      %v2618 = vsel %vm562, %v2560, 0.0
      %v2619 = vadd.f32 %v2617, %v2618
      %v2620 = vsel %vm562, %v2561, 0.0
      %v2621 = vadd.f32 %v2619, %v2620
      %v2622 = vsel %vm562, %v2562, 0.0
      %v2623 = vadd.f32 %v2621, %v2622
      %v2624 = vsel %vm562, %v2563, 0.0
      %v2625 = vadd.f32 %v2623, %v2624
      %v2626 = vsel %vm562, %v2564, 0.0
      %v2627 = vadd.f32 %v2625, %v2626
      %v2628 = vrot.slane %v2627, 4
      %v2629 = vadd.f32 %v2627, %v2628
      %v2630 = vrot.slane %v2629, 2
      %v2631 = vadd.f32 %v2629, %v2630
      %v2632 = vrot.slane %v2631, 1
      %v2633 = vadd.f32 %v2631, %v2632
      %v2634 = vmul.f32 %v2533, %v2533
      %v2635 = vmul.f32 %v2534, %v2534
      %v2636 = vmul.f32 %v2535, %v2535
      %v2637 = vmul.f32 %v2536, %v2536
      %v2638 = vmul.f32 %v2537, %v2537
      %v2639 = vmul.f32 %v2538, %v2538
      %v2640 = vmul.f32 %v2539, %v2539
      %v2641 = vmul.f32 %v2540, %v2540
      %v2642 = vmul.f32 %v2541, %v2541
      %v2643 = vmul.f32 %v2542, %v2542
      %v2644 = vmul.f32 %v2543, %v2543
      %v2645 = vmul.f32 %v2544, %v2544
      %v2646 = vmul.f32 %v2545, %v2545
      %v2647 = vmul.f32 %v2546, %v2546
      %v2648 = vmul.f32 %v2547, %v2547
      %v2649 = vmul.f32 %v2548, %v2548
      %v2650 = vmul.f32 %v2549, %v2549
      %v2651 = vmul.f32 %v2550, %v2550
      %v2652 = vmul.f32 %v2551, %v2551
      %v2653 = vmul.f32 %v2552, %v2552
      %v2654 = vmul.f32 %v2553, %v2553
      %v2655 = vmul.f32 %v2554, %v2554
      %v2656 = vmul.f32 %v2555, %v2555
      %v2657 = vmul.f32 %v2556, %v2556
      %v2658 = vmul.f32 %v2557, %v2557
      %v2659 = vmul.f32 %v2558, %v2558
      %v2660 = vmul.f32 %v2559, %v2559
      %v2661 = vmul.f32 %v2560, %v2560
      %v2662 = vmul.f32 %v2561, %v2561
      %v2663 = vmul.f32 %v2562, %v2562
      %v2664 = vmul.f32 %v2563, %v2563
      %v2665 = vmul.f32 %v2564, %v2564
      %v2666 = vsel %vm562, %v2634, 0.0
      %v2667 = vsel %vm562, %v2635, 0.0
      %v2668 = vadd.f32 %v2666, %v2667
      %v2669 = vsel %vm562, %v2636, 0.0
      %v2670 = vadd.f32 %v2668, %v2669
      %v2671 = vsel %vm562, %v2637, 0.0
      %v2672 = vadd.f32 %v2670, %v2671
      %v2673 = vsel %vm562, %v2638, 0.0
      %v2674 = vadd.f32 %v2672, %v2673
      %v2675 = vsel %vm562, %v2639, 0.0
      %v2676 = vadd.f32 %v2674, %v2675
      %v2677 = vsel %vm562, %v2640, 0.0
      %v2678 = vadd.f32 %v2676, %v2677
      %v2679 = vsel %vm562, %v2641, 0.0
      %v2680 = vadd.f32 %v2678, %v2679
      %v2681 = vsel %vm562, %v2642, 0.0
      %v2682 = vadd.f32 %v2680, %v2681
      %v2683 = vsel %vm562, %v2643, 0.0
      %v2684 = vadd.f32 %v2682, %v2683
      %v2685 = vsel %vm562, %v2644, 0.0
      %v2686 = vadd.f32 %v2684, %v2685
      %v2687 = vsel %vm562, %v2645, 0.0
      %v2688 = vadd.f32 %v2686, %v2687
      %v2689 = vsel %vm562, %v2646, 0.0
      %v2690 = vadd.f32 %v2688, %v2689
      %v2691 = vsel %vm562, %v2647, 0.0
      %v2692 = vadd.f32 %v2690, %v2691
      %v2693 = vsel %vm562, %v2648, 0.0
      %v2694 = vadd.f32 %v2692, %v2693
      %v2695 = vsel %vm562, %v2649, 0.0
      %v2696 = vadd.f32 %v2694, %v2695
      %v2697 = vsel %vm562, %v2650, 0.0
      %v2698 = vadd.f32 %v2696, %v2697
      %v2699 = vsel %vm562, %v2651, 0.0
      %v2700 = vadd.f32 %v2698, %v2699
      %v2701 = vsel %vm562, %v2652, 0.0
      %v2702 = vadd.f32 %v2700, %v2701
      %v2703 = vsel %vm562, %v2653, 0.0
      %v2704 = vadd.f32 %v2702, %v2703
      %v2705 = vsel %vm562, %v2654, 0.0
      %v2706 = vadd.f32 %v2704, %v2705
      %v2707 = vsel %vm562, %v2655, 0.0
      %v2708 = vadd.f32 %v2706, %v2707
      %v2709 = vsel %vm562, %v2656, 0.0
      %v2710 = vadd.f32 %v2708, %v2709
      %v2711 = vsel %vm562, %v2657, 0.0
      %v2712 = vadd.f32 %v2710, %v2711
      %v2713 = vsel %vm562, %v2658, 0.0
      %v2714 = vadd.f32 %v2712, %v2713
      %v2715 = vsel %vm562, %v2659, 0.0
      %v2716 = vadd.f32 %v2714, %v2715
      %v2717 = vsel %vm562, %v2660, 0.0
      %v2718 = vadd.f32 %v2716, %v2717
      %v2719 = vsel %vm562, %v2661, 0.0
      %v2720 = vadd.f32 %v2718, %v2719
      %v2721 = vsel %vm562, %v2662, 0.0
      %v2722 = vadd.f32 %v2720, %v2721
      %v2723 = vsel %vm562, %v2663, 0.0
      %v2724 = vadd.f32 %v2722, %v2723
      %v2725 = vsel %vm562, %v2664, 0.0
      %v2726 = vadd.f32 %v2724, %v2725
      %v2727 = vsel %vm562, %v2665, 0.0
      %v2728 = vadd.f32 %v2726, %v2727
      %v2729 = vrot.slane %v2728, 4
      %v2730 = vadd.f32 %v2728, %v2729
      %v2731 = vrot.slane %v2730, 2
      %v2732 = vadd.f32 %v2730, %v2731
      %v2733 = vrot.slane %v2732, 1
      %v2734 = vadd.f32 %v2732, %v2733
      %v2735 = vmul.f32 %v2633, 0.00390625
      %v2736 = vmul.f32 %v2734, 0.00390625
      %v2737 = vmul.f32 %v2735, %v2735
      %v2738 = vsub.f32 %v2736, %v2737
      %v2739 = vmax.f32 %v2738, 0.0
      %v2740 = vsub.f32 %v2533, %v2735
      %v2741 = vsub.f32 %v2534, %v2735
      %v2742 = vsub.f32 %v2535, %v2735
      %v2743 = vsub.f32 %v2536, %v2735
      %v2744 = vsub.f32 %v2537, %v2735
      %v2745 = vsub.f32 %v2538, %v2735
      %v2746 = vsub.f32 %v2539, %v2735
      %v2747 = vsub.f32 %v2540, %v2735
      %v2748 = vsub.f32 %v2541, %v2735
      %v2749 = vsub.f32 %v2542, %v2735
      %v2750 = vsub.f32 %v2543, %v2735
      %v2751 = vsub.f32 %v2544, %v2735
      %v2752 = vsub.f32 %v2545, %v2735
      %v2753 = vsub.f32 %v2546, %v2735
      %v2754 = vsub.f32 %v2547, %v2735
      %v2755 = vsub.f32 %v2548, %v2735
      %v2756 = vsub.f32 %v2549, %v2735
      %v2757 = vsub.f32 %v2550, %v2735
      %v2758 = vsub.f32 %v2551, %v2735
      %v2759 = vsub.f32 %v2552, %v2735
      %v2760 = vsub.f32 %v2553, %v2735
      %v2761 = vsub.f32 %v2554, %v2735
      %v2762 = vsub.f32 %v2555, %v2735
      %v2763 = vsub.f32 %v2556, %v2735
      %v2764 = vsub.f32 %v2557, %v2735
      %v2765 = vsub.f32 %v2558, %v2735
      %v2766 = vsub.f32 %v2559, %v2735
      %v2767 = vsub.f32 %v2560, %v2735
      %v2768 = vsub.f32 %v2561, %v2735
      %v2769 = vsub.f32 %v2562, %v2735
      %v2770 = vsub.f32 %v2563, %v2735
      %v2771 = vsub.f32 %v2564, %v2735
      %v2772 = vadd.f32 %v2739, 1e-05
      %v2773 = vrsqrt.pop %v2772
      %v2774 = vmul.f32 %v2740, %v2773
      %v2775 = vmul.f32 %v2741, %v2773
      %v2776 = vmul.f32 %v2742, %v2773
      %v2777 = vmul.f32 %v2743, %v2773
      %v2778 = vmul.f32 %v2744, %v2773
      %v2779 = vmul.f32 %v2745, %v2773
      %v2780 = vmul.f32 %v2746, %v2773
      %v2781 = vmul.f32 %v2747, %v2773
      %v2782 = vmul.f32 %v2748, %v2773
      %v2783 = vmul.f32 %v2749, %v2773
      %v2784 = vmul.f32 %v2750, %v2773
      %v2785 = vmul.f32 %v2751, %v2773
      %v2786 = vmul.f32 %v2752, %v2773
      %v2787 = vmul.f32 %v2753, %v2773
      %v2788 = vmul.f32 %v2754, %v2773
      %v2789 = vmul.f32 %v2755, %v2773
      %v2790 = vmul.f32 %v2756, %v2773
      %v2791 = vmul.f32 %v2757, %v2773
      %v2792 = vmul.f32 %v2758, %v2773
      %v2793 = vmul.f32 %v2759, %v2773
      %v2794 = vmul.f32 %v2760, %v2773
      %v2795 = vmul.f32 %v2761, %v2773
      %v2796 = vmul.f32 %v2762, %v2773
      %v2797 = vmul.f32 %v2763, %v2773
      %v2798 = vmul.f32 %v2764, %v2773
      %v2799 = vmul.f32 %v2765, %v2773
      %v2800 = vmul.f32 %v2766, %v2773
      %v2801 = vmul.f32 %v2767, %v2773
      %v2802 = vmul.f32 %v2768, %v2773
      %v2803 = vmul.f32 %v2769, %v2773
      %v2804 = vmul.f32 %v2770, %v2773
      %v2805 = vmul.f32 %v2771, %v2773
      %v2806 = vadd.f32 %v172, %v2774
      %v2807 = vadd.f32 %v173, %v2775
      %v2808 = vadd.f32 %v174, %v2776
      %v2809 = vadd.f32 %v175, %v2777
      %v2810 = vadd.f32 %v176, %v2778
      %v2811 = vadd.f32 %v177, %v2779
      %v2812 = vadd.f32 %v178, %v2780
      %v2813 = vadd.f32 %v179, %v2781
      %v2814 = vadd.f32 %v180, %v2782
      %v2815 = vadd.f32 %v181, %v2783
      %v2816 = vadd.f32 %v182, %v2784
      %v2817 = vadd.f32 %v183, %v2785
      %v2818 = vadd.f32 %v184, %v2786
      %v2819 = vadd.f32 %v185, %v2787
      %v2820 = vadd.f32 %v186, %v2788
      %v2821 = vadd.f32 %v187, %v2789
      %v2822 = vadd.f32 %v188, %v2790
      %v2823 = vadd.f32 %v189, %v2791
      %v2824 = vadd.f32 %v190, %v2792
      %v2825 = vadd.f32 %v191, %v2793
      %v2826 = vadd.f32 %v192, %v2794
      %v2827 = vadd.f32 %v193, %v2795
      %v2828 = vadd.f32 %v194, %v2796
      %v2829 = vadd.f32 %v195, %v2797
      %v2830 = vadd.f32 %v196, %v2798
      %v2831 = vadd.f32 %v197, %v2799
      %v2832 = vadd.f32 %v198, %v2800
      %v2833 = vadd.f32 %v199, %v2801
      %v2834 = vadd.f32 %v200, %v2802
      %v2835 = vadd.f32 %v201, %v2803
      %v2836 = vadd.f32 %v202, %v2804
      %v2837 = vadd.f32 %v203, %v2805
      %2838 = vst.msk [vmem:[%s170] sm:$0xff] %vm562, %v2806
      %2839 = vst.msk [vmem:[%s170 + $0x8] sm:$0xff] %vm562, %v2807
      %2840 = vst.msk [vmem:[%s170 + $0x10] sm:$0xff] %vm562, %v2808
      %2841 = vst.msk [vmem:[%s170 + $0x18] sm:$0xff] %vm562, %v2809
      %2842 = vst.msk [vmem:[%s170 + $0x20] sm:$0xff] %vm562, %v2810
      %2843 = vst.msk [vmem:[%s170 + $0x28] sm:$0xff] %vm562, %v2811
      %2844 = vst.msk [vmem:[%s170 + $0x30] sm:$0xff] %vm562, %v2812
      %2845 = vst.msk [vmem:[%s170 + $0x38] sm:$0xff] %vm562, %v2813
      %2846 = vst.msk [vmem:[%s170 + $0x40] sm:$0xff] %vm562, %v2814
      %2847 = vst.msk [vmem:[%s170 + $0x48] sm:$0xff] %vm562, %v2815
      %2848 = vst.msk [vmem:[%s170 + $0x50] sm:$0xff] %vm562, %v2816
      %2849 = vst.msk [vmem:[%s170 + $0x58] sm:$0xff] %vm562, %v2817
      %2850 = vst.msk [vmem:[%s170 + $0x60] sm:$0xff] %vm562, %v2818
      %2851 = vst.msk [vmem:[%s170 + $0x68] sm:$0xff] %vm562, %v2819
      %2852 = vst.msk [vmem:[%s170 + $0x70] sm:$0xff] %vm562, %v2820
      %2853 = vst.msk [vmem:[%s170 + $0x78] sm:$0xff] %vm562, %v2821
      %2854 = vst.msk [vmem:[%s170 + $0x80] sm:$0xff] %vm562, %v2822
      %2855 = vst.msk [vmem:[%s170 + $0x88] sm:$0xff] %vm562, %v2823
      %2856 = vst.msk [vmem:[%s170 + $0x90] sm:$0xff] %vm562, %v2824
      %2857 = vst.msk [vmem:[%s170 + $0x98] sm:$0xff] %vm562, %v2825
      %2858 = vst.msk [vmem:[%s170 + $0xa0] sm:$0xff] %vm562, %v2826
      %2859 = vst.msk [vmem:[%s170 + $0xa8] sm:$0xff] %vm562, %v2827
      %2860 = vst.msk [vmem:[%s170 + $0xb0] sm:$0xff] %vm562, %v2828
      %2861 = vst.msk [vmem:[%s170 + $0xb8] sm:$0xff] %vm562, %v2829
      %2862 = vst.msk [vmem:[%s170 + $0xc0] sm:$0xff] %vm562, %v2830
      %2863 = vst.msk [vmem:[%s170 + $0xc8] sm:$0xff] %vm562, %v2831
      %2864 = vst.msk [vmem:[%s170 + $0xd0] sm:$0xff] %vm562, %v2832
      %2865 = vst.msk [vmem:[%s170 + $0xd8] sm:$0xff] %vm562, %v2833
      %2866 = vst.msk [vmem:[%s170 + $0xe0] sm:$0xff] %vm562, %v2834
      %2867 = vst.msk [vmem:[%s170 + $0xe8] sm:$0xff] %vm562, %v2835
      %2868 = vst.msk [vmem:[%s170 + $0xf0] sm:$0xff] %vm562, %v2836
      %2869 = vst.msk [vmem:[%s170 + $0xf8] sm:$0xff] %vm562, %v2837
      %p2870 = scmp.lt.s32.totalorder %s14, 1
      %s2871 = scalar_select %p2870, %s14, 1
      %s2872 = smul.addr %s2871, 32
      %s2873 = smul.addr %s2872, 8
      %s2874 = scalar_lea.vmem %s3, %s2873
      // Predicated region
      $region33: #{tpu_custom_call.1} parent=31 // pred_check
        %p2875 = pneg %p100
      $region34: #{tpu_custom_call.1} parent=31 // pred_check_branch
        %2877 = sbr.rel (%p2875) target = $region36
      $region35: #{tpu_custom_call.1} parent=31 // pred_region
        _
      $region36: #{tpu_custom_call.1} parent=31 // pred_fallthru
        _
    $region32: #{tpu_custom_call.1} parent=5 // pred_fallthru
      _
    %p2878 = scmp.le.s32.totalorder 2, %s9
    // Predicated region
    $region37: #{tpu_custom_call.1} parent=5 // pred_check
      %p2879 = pneg %p2878
    $region38: #{tpu_custom_call.1} parent=5 // pred_check_branch
      %2881 = sbr.rel (%p2879) target = $region40
    $region39: #{tpu_custom_call.1} parent=5 // pred_region
      %s2882 = ssub.s32 %s9, 2
      // Predicated region
      $region41: #{tpu_custom_call.1} parent=39 // pred_check
        %p2883 = pneg %p106
      $region42: #{tpu_custom_call.1} parent=39 // pred_check_branch
        %2885 = sbr.rel (%p2883) target = $region44
      $region43: #{tpu_custom_call.1} parent=39 // pred_region
        %p2886 = scmp.lt.s32.totalorder %s15, 1
        %s2887 = scalar_select %p2886, %s15, 1
        %s2888 = smul.addr %s2887, 32
        %s2889 = smul.addr %s2888, 8
        %s2890 = scalar_lea.vmem %s3, %s2889
      $region44: #{tpu_custom_call.1} parent=39 // pred_fallthru
        _
    $region40: #{tpu_custom_call.1} parent=5 // pred_fallthru
      _
  $region6: #{tpu_custom_call.1} parent=0 // loop_footer
    %s13 = sadd.s32 1, %s9
  $region7: #{tpu_custom_call.1} parent=0 // loop_footer_branch
    %8 = sbr.rel target = $region3
  $region8: #{tpu_custom_call.1} parent=0 // loop_exit
    _

</llo_original>
